<compile_context>
chip_gen: v6e
topology: v6e:2x2x1
jax: 0.10.0
libtpu: 0.0.40
codegen_flags: <defaults>
</compile_context>

<pallas_src>
import jax
import jax.numpy as jnp
from jax.experimental import pallas as pl
from jax.experimental.pallas import tpu as pltpu


def user_embedder_kernel(idx_ref, m_ref, b1_ref, w2_ref, b2_ref, out_ref):
    """Fused embedding-gather + 2-layer MLP for one (TB, ...) batch tile."""
    idx_off = idx_ref[...]                               # (TB, Din) int32, pre-offset by d*NE
    tb, din = idx_off.shape
    k = m_ref.shape[0]                                   # Din * NE

    # One-hot over the fused (Din*NE) axis: column d*NE + idx[b, d] is hot.
    # Din compares + ORs on the VPU (disjoint column ranges per d), one cast;
    # no relayouts, no f32 accumulator.
    iota = jax.lax.broadcasted_iota(jnp.int32, (tb, k), 1)
    hit = iota == idx_off[:, 0:1]
    for d in range(1, din):                              # Din is small; boolean-only liveness
        hit = hit | (iota == idx_off[:, d:d + 1])
    onehot = hit.astype(jnp.bfloat16)                    # (TB, Din*NE)

    # h = flatten(table[idx]) @ w1 + b1  ==  onehot @ M + b1 : one K=Din*NE MXU push,
    # f32 accumulation, bias + ReLU in f32 (v5e has no bf16 VPU).
    h = jnp.dot(onehot, m_ref[...], preferred_element_type=jnp.float32) + b1_ref[...]
    h = jnp.maximum(h, 0.0)

    out = jnp.dot(h.astype(jnp.bfloat16), w2_ref[...],
                  preferred_element_type=jnp.float32) + b2_ref[...]
    out_ref[...] = out.astype(out_ref.dtype)             # (TB, OUT_PAD) lane-dense bf16 store


def _round_up(x: int, m: int) -> int:
    return (x + m - 1) // m * m


def _choose_tb(b: int, tb_max: int = 512) -> int:
    """Batch tile: even #grid-steps >= 2 (feeds both v7x TCs), tile <= tb_max
    so single-TC v5e/v6e amortize the ~0.35us per-grid-step overhead."""
    b8 = _round_up(b, 8)
    if b8 <= 16:
        return b8                                        # tiny batch: single step
    steps = max(2, 2 * pl.cdiv(b8, 2 * tb_max))          # even number of steps
    return _round_up(pl.cdiv(b8, steps), 8)


def user_embedder(idx, table, w1, b1, w2, b2, *, tb: int | None = None):
    """idx:(B,Din) int32, table:(NE,E), w1:(Din*E,H), b1:(H,), w2:(H,O), b2:(O,)."""
    B, din = idx.shape
    ne, e = table.shape
    in_size, hidden = w1.shape
    out_size = w2.shape[1]
    assert in_size == din * e

    if tb is None:
        tb = _choose_tb(B)
    b_pad = _round_up(B, tb)
    out_pad = _round_up(out_size, 128)                   # lane-dense output block

    # Pre-offset indices so the kernel builds one (TB, Din*NE) one-hot directly.
    idx_off = idx.astype(jnp.int32) + (jnp.arange(din, dtype=jnp.int32) * ne)[None, :]
    if b_pad != B:
        idx_off = jnp.pad(idx_off, ((0, b_pad - B), (0, 0)))

    # Fold the embedding table into Linear1:
    #   M[d*NE + n, h] = sum_e table[n, e] * w1[d*E + e, h]   (f32 compute, bf16 store)
    m = jnp.einsum("ne,deh->dnh", table.astype(jnp.float32),
                   w1.astype(jnp.float32).reshape(din, e, hidden))
    m = m.reshape(din * ne, hidden).astype(jnp.bfloat16)

    w2_b = jnp.pad(w2, ((0, 0), (0, out_pad - out_size))).astype(jnp.bfloat16)
    b1_2d = b1.reshape(1, hidden).astype(jnp.float32)
    b2_2d = jnp.pad(b2.reshape(1, out_size),
                    ((0, 0), (0, out_pad - out_size))).astype(jnp.float32)

    grid = (b_pad // tb,)
    k = din * ne
    flops = 2 * b_pad * k * hidden + 2 * b_pad * hidden * out_pad
    bytes_accessed = (idx_off.size * 4 + m.size * 2 + w2_b.size * 2
                      + b1_2d.size * 4 + b2_2d.size * 4 + b_pad * out_pad * 2)

    out = pl.pallas_call(
        user_embedder_kernel,
        out_shape=jax.ShapeDtypeStruct((b_pad, out_pad), jnp.bfloat16),
        grid=grid,
        in_specs=[
            pl.BlockSpec((tb, din), lambda i: (i, 0)),           # idx_off: batch-tiled
            pl.BlockSpec((k, hidden), lambda i: (0, 0)),         # M: VMEM-resident
            pl.BlockSpec((1, hidden), lambda i: (0, 0)),         # b1: resident
            pl.BlockSpec((hidden, out_pad), lambda i: (0, 0)),   # w2: resident
            pl.BlockSpec((1, out_pad), lambda i: (0, 0)),        # b2: resident
        ],
        out_specs=pl.BlockSpec((tb, out_pad), lambda i: (i, 0)),
        compiler_params=pltpu.CompilerParams(
            dimension_semantics=("parallel",),
            vmem_limit_bytes=32 * 1024 * 1024),
        cost_estimate=pl.CostEstimate(flops=flops, transcendentals=0,
                                      bytes_accessed=bytes_accessed),
    )(idx_off, m, b1_2d, w2_b, b2_2d)

    return out[:B, :out_size].astype(jnp.float32)


def user_embedder_ref(idx, table, w1, b1, w2, b2):
    """Pure-JAX f32 reference matching the PyTorch forward."""
    emb = table[idx]                                     # (B, Din, E)
    flat = emb.reshape(emb.shape[0], -1)                 # (B, Din*E)
    h = jnp.maximum(flat @ w1 + b1.reshape(1, -1), 0.0)
    return h @ w2 + b2.reshape(1, -1)


if __name__ == "__main__":
    # Shapes consistent with the module's __init__ (batch chosen to exercise the grid).
    num_embeddings = 64
    embedding_dim = 32
    input_dim = 8
    output_size = 16
    factor = 2

    input_size = input_dim * embedding_dim               # 256
    hidden = input_size // factor                        # 128
    B = 256                                              # grid = (2,) with TB = 128

    key = jax.random.PRNGKey(0)
    k_idx, k_tab, k_w1, k_b1, k_w2, k_b2 = jax.random.split(key, 6)

    idx = jax.random.randint(k_idx, (B, input_dim), 0, num_embeddings, dtype=jnp.int32)
    table = jax.random.normal(k_tab, (num_embeddings, embedding_dim), jnp.float32)
    w1 = jax.random.normal(k_w1, (input_size, hidden), jnp.float32) * 0.05
    b1 = jax.random.normal(k_b1, (hidden,), jnp.float32) * 0.05
    w2 = jax.random.normal(k_w2, (hidden, output_size), jnp.float32) * 0.05
    b2 = jax.random.normal(k_b2, (output_size,), jnp.float32) * 0.05

    out = jax.block_until_ready(user_embedder(idx, table, w1, b1, w2, b2))
    ref = user_embedder_ref(idx, table, w1, b1, w2, b2)

    assert out.shape == (B, output_size)
    # bf16 MXU operands / bf16 M fold / bf16 writeback with f32 accumulation
    # => looser tolerance than pure f32.
    assert jnp.allclose(out, ref, atol=5e-2, rtol=5e-2), "mismatch vs reference"

    print("KERNEL_OK")
</pallas_src>

<mosaic_0001>
module attributes {stable_mosaic.version = 11 : i64} {
  func.func @user_embedder_kernel(%arg0: i32, %arg1: memref<128x8xi32, #tpu.memory_space<vmem>>, %arg2: memref<512x128xbf16, #tpu.memory_space<vmem>>, %arg3: memref<1x128xf32, #tpu.memory_space<vmem>>, %arg4: memref<128x128xbf16, #tpu.memory_space<vmem>>, %arg5: memref<1x128xf32, #tpu.memory_space<vmem>>, %arg6: memref<128x128xbf16, #tpu.memory_space<vmem>>) attributes {dimension_semantics = [#tpu.dimension_semantics<parallel>], iteration_bounds = array<i64: 2>, scalar_prefetch = 0 : i64, scratch_operands = 0 : i64, tpu.core_type = #tpu.core_type<tc>, window_params = [{transform_indices = @transform_0, window_bounds = array<i64: 128, 8>}, {pipeline_mode = #tpu.pipeline_mode<synchronous>, transform_indices = @transform_1, window_bounds = array<i64: 512, 128>}, {pipeline_mode = #tpu.pipeline_mode<synchronous>, transform_indices = @transform_2, window_bounds = array<i64: 1, 128>}, {pipeline_mode = #tpu.pipeline_mode<synchronous>, transform_indices = @transform_3, window_bounds = array<i64: 128, 128>}, {pipeline_mode = #tpu.pipeline_mode<synchronous>, transform_indices = @transform_4, window_bounds = array<i64: 1, 128>}, {transform_indices = @transform_5, window_bounds = array<i64: 128, 128>}]} {
    %c0 = arith.constant 0 : index
    %c0_0 = arith.constant 0 : index
    %0 = vector.load %arg1[%c0, %c0_0] : memref<128x8xi32, #tpu.memory_space<vmem>>, vector<128x8xi32>
    %1 = tpu.iota {dimensions = array<i32: 1>} : vector<128x512xi32>
    %2 = vector.extract_strided_slice %0 {offsets = [0, 0], sizes = [128, 1], strides = [1, 1]} : vector<128x8xi32> to vector<128x1xi32>
    %3 = vector.broadcast %2 : vector<128x1xi32> to vector<128x512xi32>
    %4 = arith.cmpi eq, %1, %3 : vector<128x512xi32>
    %5 = vector.extract_strided_slice %0 {offsets = [0, 1], sizes = [128, 1], strides = [1, 1]} : vector<128x8xi32> to vector<128x1xi32>
    %6 = vector.broadcast %5 : vector<128x1xi32> to vector<128x512xi32>
    %7 = arith.cmpi eq, %1, %6 : vector<128x512xi32>
    %8 = arith.ori %4, %7 : vector<128x512xi1>
    %9 = vector.extract_strided_slice %0 {offsets = [0, 2], sizes = [128, 1], strides = [1, 1]} : vector<128x8xi32> to vector<128x1xi32>
    %10 = vector.broadcast %9 : vector<128x1xi32> to vector<128x512xi32>
    %11 = arith.cmpi eq, %1, %10 : vector<128x512xi32>
    %12 = arith.ori %8, %11 : vector<128x512xi1>
    %13 = vector.extract_strided_slice %0 {offsets = [0, 3], sizes = [128, 1], strides = [1, 1]} : vector<128x8xi32> to vector<128x1xi32>
    %14 = vector.broadcast %13 : vector<128x1xi32> to vector<128x512xi32>
    %15 = arith.cmpi eq, %1, %14 : vector<128x512xi32>
    %16 = arith.ori %12, %15 : vector<128x512xi1>
    %17 = vector.extract_strided_slice %0 {offsets = [0, 4], sizes = [128, 1], strides = [1, 1]} : vector<128x8xi32> to vector<128x1xi32>
    %18 = vector.broadcast %17 : vector<128x1xi32> to vector<128x512xi32>
    %19 = arith.cmpi eq, %1, %18 : vector<128x512xi32>
    %20 = arith.ori %16, %19 : vector<128x512xi1>
    %21 = vector.extract_strided_slice %0 {offsets = [0, 5], sizes = [128, 1], strides = [1, 1]} : vector<128x8xi32> to vector<128x1xi32>
    %22 = vector.broadcast %21 : vector<128x1xi32> to vector<128x512xi32>
    %23 = arith.cmpi eq, %1, %22 : vector<128x512xi32>
    %24 = arith.ori %20, %23 : vector<128x512xi1>
    %25 = vector.extract_strided_slice %0 {offsets = [0, 6], sizes = [128, 1], strides = [1, 1]} : vector<128x8xi32> to vector<128x1xi32>
    %26 = vector.broadcast %25 : vector<128x1xi32> to vector<128x512xi32>
    %27 = arith.cmpi eq, %1, %26 : vector<128x512xi32>
    %28 = arith.ori %24, %27 : vector<128x512xi1>
    %29 = vector.extract_strided_slice %0 {offsets = [0, 7], sizes = [128, 1], strides = [1, 1]} : vector<128x8xi32> to vector<128x1xi32>
    %30 = vector.broadcast %29 : vector<128x1xi32> to vector<128x512xi32>
    %31 = arith.cmpi eq, %1, %30 : vector<128x512xi32>
    %32 = arith.ori %28, %31 : vector<128x512xi1>
    %33 = arith.extui %32 : vector<128x512xi1> to vector<128x512xi32>
    %34 = arith.sitofp %33 : vector<128x512xi32> to vector<128x512xf32>
    %35 = arith.truncf %34 : vector<128x512xf32> to vector<128x512xbf16>
    %c0_1 = arith.constant 0 : index
    %c0_2 = arith.constant 0 : index
    %36 = vector.load %arg2[%c0_1, %c0_2] : memref<512x128xbf16, #tpu.memory_space<vmem>>, vector<512x128xbf16>
    %cst = arith.constant dense<0.000000e+00> : vector<128x128xf32>
    %37 = tpu.matmul %35, %36, %cst {dimension_numbers = #tpu.dot_dimension_numbers<[1], [0], [0], [1], [0, 0, 1, 1], [], []>} : vector<128x512xbf16>, vector<512x128xbf16>, vector<128x128xf32> -> vector<128x128xf32>
    %c0_3 = arith.constant 0 : index
    %c0_4 = arith.constant 0 : index
    %38 = vector.load %arg3[%c0_3, %c0_4] : memref<1x128xf32, #tpu.memory_space<vmem>>, vector<1x128xf32>
    %39 = vector.broadcast %38 : vector<1x128xf32> to vector<128x128xf32>
    %40 = arith.addf %37, %39 : vector<128x128xf32>
    %cst_5 = arith.constant 0.000000e+00 : f32
    %41 = vector.broadcast %cst_5 : f32 to vector<128x128xf32>
    %42 = arith.maximumf %40, %41 : vector<128x128xf32>
    %43 = arith.truncf %42 : vector<128x128xf32> to vector<128x128xbf16>
    %c0_6 = arith.constant 0 : index
    %c0_7 = arith.constant 0 : index
    %44 = vector.load %arg4[%c0_6, %c0_7] : memref<128x128xbf16, #tpu.memory_space<vmem>>, vector<128x128xbf16>
    %cst_8 = arith.constant dense<0.000000e+00> : vector<128x128xf32>
    %45 = tpu.matmul %43, %44, %cst_8 {dimension_numbers = #tpu.dot_dimension_numbers<[1], [0], [0], [1], [0, 0, 1, 1], [], []>} : vector<128x128xbf16>, vector<128x128xbf16>, vector<128x128xf32> -> vector<128x128xf32>
    %c0_9 = arith.constant 0 : index
    %c0_10 = arith.constant 0 : index
    %46 = vector.load %arg5[%c0_9, %c0_10] : memref<1x128xf32, #tpu.memory_space<vmem>>, vector<1x128xf32>
    %47 = vector.broadcast %46 : vector<1x128xf32> to vector<128x128xf32>
    %48 = arith.addf %45, %47 : vector<128x128xf32>
    %49 = arith.truncf %48 : vector<128x128xf32> to vector<128x128xbf16>
    %c0_11 = arith.constant 0 : index
    %c0_12 = arith.constant 0 : index
    %50 = vector.load %arg6[%c0_11, %c0_12] : memref<128x128xbf16, #tpu.memory_space<vmem>>, vector<128x128xbf16>
    tpu.vector_store %arg6[%c0_11, %c0_12], %49 {strides = array<i32>} : memref<128x128xbf16, #tpu.memory_space<vmem>>, vector<128x128xbf16>,
    return
  }
  func.func @transform_0(%arg0: i32) -> (i32, i32) {
    %c0_i32 = arith.constant 0 : i32
    %c0_i32_0 = arith.constant 0 : i32
    return %arg0, %c0_i32 : i32, i32
  }
  func.func @transform_1(%arg0: i32) -> (i32, i32) {
    %c0_i32 = arith.constant 0 : i32
    %c0_i32_0 = arith.constant 0 : i32
    %c0_i32_1 = arith.constant 0 : i32
    return %c0_i32, %c0_i32_0 : i32, i32
  }
  func.func @transform_2(%arg0: i32) -> (i32, i32) {
    %c0_i32 = arith.constant 0 : i32
    %c0_i32_0 = arith.constant 0 : i32
    %c0_i32_1 = arith.constant 0 : i32
    return %c0_i32, %c0_i32_0 : i32, i32
  }
  func.func @transform_3(%arg0: i32) -> (i32, i32) {
    %c0_i32 = arith.constant 0 : i32
    %c0_i32_0 = arith.constant 0 : i32
    %c0_i32_1 = arith.constant 0 : i32
    return %c0_i32, %c0_i32_0 : i32, i32
  }
  func.func @transform_4(%arg0: i32) -> (i32, i32) {
    %c0_i32 = arith.constant 0 : i32
    %c0_i32_0 = arith.constant 0 : i32
    %c0_i32_1 = arith.constant 0 : i32
    return %c0_i32, %c0_i32_0 : i32, i32
  }
  func.func @transform_5(%arg0: i32) -> (i32, i32) {
    %c0_i32 = arith.constant 0 : i32
    %c0_i32_0 = arith.constant 0 : i32
    return %arg0, %c0_i32 : i32, i32
  }
}

</mosaic_0001>

<llo_original>
// kernel: tpu_custom_call.1
$region0: #{tpu_custom_call.1}
  #allocation0 [shape = 'u32[]', space=smem, size = 0x4, offset = 0x4, fixed_abs, tag = 'smem constant byte address 0x4 - core index']
  #allocation1 [shape = 'u32[144,128]{1,0:T(1,128)}', space=vmem, size = 0x12000, scoped, tag = 'internal scratch']
  %s0 = inlined_call_operand.vmem [shape: s32[256,8], index: 0, kind: input, shape index: {}]
  %s1 = inlined_call_operand.vmem [shape: bf16[512,128], index: 1, kind: input, shape index: {}]
  %s2 = inlined_call_operand.vmem [shape: f32[1,128], index: 2, kind: input, shape index: {}]
  %s3 = inlined_call_operand.hbm [shape: bf16[128,128], index: 3, kind: input, shape index: {}]
  %s4 = inlined_call_operand.vmem [shape: f32[1,128], index: 4, kind: input, shape index: {}]
  %s5 = inlined_call_operand.hbm [shape: bf16[256,128], index: 5, kind: output, shape index: {}]
  %s6 = sld [smem:[#allocation0]]
  $region57: #{tpu_custom_call.1} parent=0
    _
  %s8 = ssub.s32 1, %s6
  %s9 = scalar_select 0, %s8, %s6
  $region1: #{tpu_custom_call.1} parent=0
    #allocation2 [shape = 'u8[32768]{0}', space=vmem, size = 0x8000, scoped, tag = 'input window, operand 3, single buffered']
    #allocation3 [shape = 's32[2]{0}', space=sflag, size = 0x8, scoped, tag = 'scoped memory for tpu_custom_call.1']
    #allocation4 [shape = 's32[2]{0}', space=sflag, size = 0x8, scoped, tag = 'scoped memory for tpu_custom_call.1']
    #allocation5 [shape = 'u8[65536]{0}', space=vmem, size = 0x10000, scoped, tag = 'output window, operand 0']
    %10 = vsyncpa [#allocation3], 0
    %11 = vsyncpa [#allocation4], 0
    %s12 = scalar_lea.sflag [#allocation4], 1
    %13 = vsyncpa %s12, 0
    loop: start=0, step=1, limit=4
    $region2: #{tpu_custom_call.1} parent=1 // loop_pre_header
      _
    $region3: #{tpu_custom_call.1} parent=1 // loop_header
      %s15 = sphi 0, %s19
      %p16 = scmp.ge.s32.totalorder %s15, 4
      %s25 = sphi 0, %s27
      %s28 = sphi 0, %s25
      %s29 = sphi 0, %s28
      %s45 = sphi 0, %s29
      %s49 = sphi 0, %s49
      %s51 = sphi 0, %s49
      %s52 = sphi 0, %s51
      %s66 = sphi 0, %s52
      %s70 = sphi 0, %s70
      %s72 = sphi 0, %s70
      %s73 = sphi 0, %s72
      %s87 = sphi 0, %s73
      %s91 = sphi 0, %s91
      %s93 = sphi 0, %s91
      %s94 = sphi 0, %s93
      %s108 = sphi 0, %s94
      %s112 = sphi 0, %s112
      %s114 = sphi 0, %s112
      %s115 = sphi 0, %s114
      %s129 = sphi 0, %s115
      %s135 = sphi 0, %s137
      %s138 = sphi 0, %s135
      %s139 = sphi 0, %s138
      %s155 = sphi 0, %s139
    $region4: #{tpu_custom_call.1} parent=1 // loop_header_branch
      %18 = sbr.rel (%p16) target = $region8
    $region5: #{tpu_custom_call.1} parent=1 // loop_body
      %s20 = ssub.s32 %s15, 1
      %s21 = ssub.s32 %s15, 2
      %s22 = sadd.s32 %s15, 1
      %s23 = ssub.s32 %s15, %s22
      %p24 = scmp.eq.s32.totalorder %s23, 0
      %s26 = sadd.s32 %s25, 1
      %s27 = scalar_select %p24, %s25, %s26
      %p30 = pneg %p24
      %p31 = scmp.eq.s32.totalorder %s15, 1
      %p32 = por %p30, %p31
      %p33 = scmp.ne.s32.totalorder %s25, %s28
      %p34 = scmp.eq.s32.totalorder %s15, 0
      %p35 = por %p33, %p34
      %p36 = scmp.ne.s32.totalorder %s25, %s28
      %p37 = scmp.eq.s32.totalorder %s20, 1
      %p38 = por %p36, %p37
      %p39 = scmp.ne.s32.totalorder %s28, %s29
      %p40 = scmp.eq.s32.totalorder %s20, 0
      %p41 = por %p39, %p40
      %p42 = scmp.ne.s32.totalorder %s28, %s29
      %p43 = scmp.eq.s32.totalorder %s21, 1
      %p44 = por %p42, %p43
      %p46 = scmp.ne.s32.totalorder %s29, %s45
      %p47 = scmp.eq.s32.totalorder %s21, 0
      %p48 = por %p46, %p47
      %s50 = sadd.s32 %s49, 1
      %p53 = scmp.eq.s32.totalorder %s15, 1
      %p54 = scmp.ne.s32.totalorder %s49, %s51
      %p55 = scmp.eq.s32.totalorder %s15, 0
      %p56 = por %p54, %p55
      %p57 = scmp.ne.s32.totalorder %s49, %s51
      %p58 = scmp.eq.s32.totalorder %s20, 1
      %p59 = por %p57, %p58
      %p60 = scmp.ne.s32.totalorder %s51, %s52
      %p61 = scmp.eq.s32.totalorder %s20, 0
      %p62 = por %p60, %p61
      %p63 = scmp.ne.s32.totalorder %s51, %s52
      %p64 = scmp.eq.s32.totalorder %s21, 1
      %p65 = por %p63, %p64
      %p67 = scmp.ne.s32.totalorder %s52, %s66
      %p68 = scmp.eq.s32.totalorder %s21, 0
      %p69 = por %p67, %p68
      %s71 = sadd.s32 %s70, 1
      %p74 = scmp.eq.s32.totalorder %s15, 1
      %p75 = scmp.ne.s32.totalorder %s70, %s72
      %p76 = scmp.eq.s32.totalorder %s15, 0
      %p77 = por %p75, %p76
      %p78 = scmp.ne.s32.totalorder %s70, %s72
      %p79 = scmp.eq.s32.totalorder %s20, 1
      %p80 = por %p78, %p79
      %p81 = scmp.ne.s32.totalorder %s72, %s73
      %p82 = scmp.eq.s32.totalorder %s20, 0
      %p83 = por %p81, %p82
      %p84 = scmp.ne.s32.totalorder %s72, %s73
      %p85 = scmp.eq.s32.totalorder %s21, 1
      %p86 = por %p84, %p85
      %p88 = scmp.ne.s32.totalorder %s73, %s87
      %p89 = scmp.eq.s32.totalorder %s21, 0
      %p90 = por %p88, %p89
      %s92 = sadd.s32 %s91, 1
      %p95 = scmp.eq.s32.totalorder %s15, 1
      %p96 = scmp.ne.s32.totalorder %s91, %s93
      %p97 = scmp.eq.s32.totalorder %s15, 0
      %p98 = por %p96, %p97
      %p99 = scmp.ne.s32.totalorder %s91, %s93
      %p100 = scmp.eq.s32.totalorder %s20, 1
      %p101 = por %p99, %p100
      %p102 = scmp.ne.s32.totalorder %s93, %s94
      %p103 = scmp.eq.s32.totalorder %s20, 0
      %p104 = por %p102, %p103
      %p105 = scmp.ne.s32.totalorder %s93, %s94
      %p106 = scmp.eq.s32.totalorder %s21, 1
      %p107 = por %p105, %p106
      %p109 = scmp.ne.s32.totalorder %s94, %s108
      %p110 = scmp.eq.s32.totalorder %s21, 0
      %p111 = por %p109, %p110
      %s113 = sadd.s32 %s112, 1
      %p116 = scmp.eq.s32.totalorder %s15, 1
      %p117 = scmp.ne.s32.totalorder %s112, %s114
      %p118 = scmp.eq.s32.totalorder %s15, 0
      %p119 = por %p117, %p118
      %p120 = scmp.ne.s32.totalorder %s112, %s114
      %p121 = scmp.eq.s32.totalorder %s20, 1
      %p122 = por %p120, %p121
      %p123 = scmp.ne.s32.totalorder %s114, %s115
      %p124 = scmp.eq.s32.totalorder %s20, 0
      %p125 = por %p123, %p124
      %p126 = scmp.ne.s32.totalorder %s114, %s115
      %p127 = scmp.eq.s32.totalorder %s21, 1
      %p128 = por %p126, %p127
      %p130 = scmp.ne.s32.totalorder %s115, %s129
      %p131 = scmp.eq.s32.totalorder %s21, 0
      %p132 = por %p130, %p131
      %s133 = ssub.s32 %s15, %s22
      %p134 = scmp.eq.s32.totalorder %s133, 0
      %s136 = sadd.s32 %s135, 1
      %s137 = scalar_select %p134, %s135, %s136
      %p140 = pneg %p134
      %p141 = scmp.eq.s32.totalorder %s15, 1
      %p142 = por %p140, %p141
      %p143 = scmp.ne.s32.totalorder %s135, %s138
      %p144 = scmp.eq.s32.totalorder %s15, 0
      %p145 = por %p143, %p144
      %p146 = scmp.ne.s32.totalorder %s135, %s138
      %p147 = scmp.eq.s32.totalorder %s20, 1
      %p148 = por %p146, %p147
      %p149 = scmp.ne.s32.totalorder %s138, %s139
      %p150 = scmp.eq.s32.totalorder %s20, 0
      %p151 = por %p149, %p150
      %p152 = scmp.ne.s32.totalorder %s138, %s139
      %p153 = scmp.eq.s32.totalorder %s21, 1
      %p154 = por %p152, %p153
      %p156 = scmp.ne.s32.totalorder %s139, %s155
      %p157 = scmp.eq.s32.totalorder %s21, 0
      %p158 = por %p156, %p157
      %p159 = scmp.le.s32.totalorder 1, %s15
      %p160 = scmp.lt.s32.totalorder %s15, 3
      %p161 = pnand %p159, %p160
      %p162 = pneg %p161
      // Predicated region
      $region9: #{tpu_custom_call.1} parent=5 // pred_check
        _
      $region10: #{tpu_custom_call.1} parent=5 // pred_check_branch
        %164 = sbr.rel (%p161) target = $region12
      $region11: #{tpu_custom_call.1} parent=5 // pred_region
        %s165 = ssub.s32 %s15, 1
        // Predicated region
        $region13: #{tpu_custom_call.1} parent=11 // pred_check
          %p166 = pneg %p62
        $region14: #{tpu_custom_call.1} parent=11 // pred_check_branch
          %168 = sbr.rel (%p166) target = $region16
        $region15: #{tpu_custom_call.1} parent=11 // pred_region
          _
        $region16: #{tpu_custom_call.1} parent=11 // pred_fallthru
          _
        // Predicated region
        $region17: #{tpu_custom_call.1} parent=11 // pred_check
          %p169 = pneg %p83
        $region18: #{tpu_custom_call.1} parent=11 // pred_check_branch
          %171 = sbr.rel (%p169) target = $region20
        $region19: #{tpu_custom_call.1} parent=11 // pred_region
          _
        $region20: #{tpu_custom_call.1} parent=11 // pred_fallthru
          _
        // Predicated region
        $region21: #{tpu_custom_call.1} parent=11 // pred_check
          %p172 = pneg %p104
        $region22: #{tpu_custom_call.1} parent=11 // pred_check_branch
          %174 = sbr.rel (%p172) target = $region24
        $region23: #{tpu_custom_call.1} parent=11 // pred_region
          %s176 = ssub.s32 1024, 1024
          %177 = vsyncadd [#allocation3], %s176
          %s178 = sshll.u32 [#allocation2], 4
          %s179 = int_to_ptr.vmem [resolvable:$true] %s178
          %184 = dma.hbm_to_vmem [thread:$0]  %s3, 1024, %s179, [#allocation3], 64, 64, 4
        $region24: #{tpu_custom_call.1} parent=11 // pred_fallthru
          _
        // Predicated region
        $region25: #{tpu_custom_call.1} parent=11 // pred_check
          %p185 = pneg %p125
        $region26: #{tpu_custom_call.1} parent=11 // pred_check_branch
          %187 = sbr.rel (%p185) target = $region28
        $region27: #{tpu_custom_call.1} parent=11 // pred_region
          _
        $region28: #{tpu_custom_call.1} parent=11 // pred_fallthru
          _
      $region12: #{tpu_custom_call.1} parent=5 // pred_fallthru
        _
      %p188 = scmp.lt.s32.totalorder %s15, 2
      // Predicated region
      $region29: #{tpu_custom_call.1} parent=5 // pred_check
        %p189 = pneg %p188
      $region30: #{tpu_custom_call.1} parent=5 // pred_check_branch
        %191 = sbr.rel (%p189) target = $region32
      $region31: #{tpu_custom_call.1} parent=5 // pred_region
        // Predicated region
        $region33: #{tpu_custom_call.1} parent=31 // pred_check
          %p192 = pneg %p35
        $region34: #{tpu_custom_call.1} parent=31 // pred_check_branch
          %194 = sbr.rel (%p192) target = $region36
        $region35: #{tpu_custom_call.1} parent=31 // pred_region
          %s195 = smul.u32 16, %s15
          %p196 = scmp.lt.s32.totalorder %s195, 31
          %s197 = scalar_select %p196, %s195, 31
          %s198 = smul.addr %s197, 8
          %s199 = scalar_lea.vmem %s0, %s198
          %s200 = smul.u32 16, %s15
        $region36: #{tpu_custom_call.1} parent=31 // pred_fallthru
          _
      $region32: #{tpu_custom_call.1} parent=5 // pred_fallthru
        _
      %p201 = scmp.le.s32.totalorder 1, %s15
      %p202 = scmp.lt.s32.totalorder %s15, 3
      %p203 = pnand %p201, %p202
      %p204 = pneg %p203
      // Predicated region
      $region37: #{tpu_custom_call.1} parent=5 // pred_check
        _
      $region38: #{tpu_custom_call.1} parent=5 // pred_check_branch
        %206 = sbr.rel (%p203) target = $region40
      $region39: #{tpu_custom_call.1} parent=5 // pred_region
        %s207 = ssub.s32 %s15, 1
        // Predicated region
        $region41: #{tpu_custom_call.1} parent=39 // pred_check
          %p208 = pneg %p104
        $region42: #{tpu_custom_call.1} parent=39 // pred_check_branch
          %210 = sbr.rel (%p208) target = $region44
        $region43: #{tpu_custom_call.1} parent=39 // pred_region
          %211 = dma.done [#allocation3], 1024
        $region44: #{tpu_custom_call.1} parent=39 // pred_fallthru
          _
        %s212 = smul.u32 16, %s20
        %p213 = scmp.lt.s32.totalorder %s212, 31
        %s214 = scalar_select %p213, %s212, 31
        %s215 = smul.addr %s214, 8
        %s216 = scalar_lea.vmem %s0, %s215
        %p217 = pneg %p41
        %p218 = pneg %p38
        %p219 = pneg %p62
        %p220 = pneg %p59
        %p221 = pneg %p83
        %p222 = pneg %p80
        %p223 = pneg %p104
        %p224 = pneg %p101
        %p225 = pneg %p125
        %p226 = pneg %p122
        %p227 = pneg %p151
        %p228 = pneg %p148
        %s229 = sand.u32 %s138, 1
        %s230 = scalar_lea.sflag [#allocation4], %s229
        %s231 = sand.u32 %s138, 1
        %s232 = smul.addr %s231, 64
        %s233 = scalar_lea.vmem [#allocation5], %s232
        %s234 = smul.u32 16, %s20
        %p235 = scmp.lt.s32.totalorder %s234, 31
        %s236 = scalar_select %p235, %s234, 31
        %s237 = smul.addr %s236, 8
        %s238 = scalar_lea.vmem %s0, %s237
        %s239 = smul.u32 16, %s20
        %s240 = smul.u32 16, %s20
        %v242 = vld [vmem:[%s238] sm:$0xff]
        %v243 = vld [vmem:[%s238 + $0x8] sm:$0xff]
        %v244 = vld [vmem:[%s238 + $0x10] sm:$0xff]
        %v245 = vld [vmem:[%s238 + $0x18] sm:$0xff]
        %v246 = vld [vmem:[%s238 + $0x20] sm:$0xff]
        %v247 = vld [vmem:[%s238 + $0x28] sm:$0xff]
        %v248 = vld [vmem:[%s238 + $0x30] sm:$0xff]
        %v249 = vld [vmem:[%s238 + $0x38] sm:$0xff]
        %v250 = vld [vmem:[%s238 + $0x40] sm:$0xff]
        %v251 = vld [vmem:[%s238 + $0x48] sm:$0xff]
        %v252 = vld [vmem:[%s238 + $0x50] sm:$0xff]
        %v253 = vld [vmem:[%s238 + $0x58] sm:$0xff]
        %v254 = vld [vmem:[%s238 + $0x60] sm:$0xff]
        %v255 = vld [vmem:[%s238 + $0x68] sm:$0xff]
        %v256 = vld [vmem:[%s238 + $0x70] sm:$0xff]
        %v257 = vld [vmem:[%s238 + $0x78] sm:$0xff]
        %v258 = vlaneseq
        %v259 = vand.u32 %v258, 127
        %v260 = vadd.s32 %v259, 128
        %v261 = vadd.s32 %v259, 256
        %v262 = vadd.s32 %v259, 384
        %263 = vset.pattern.permute.xlu0 0
        %264 = vperm.xlu0 %263, %v242
        %v265 = vpop.permute.xlu0 %264
        %266 = vset.pattern.permute.xlu0 0
        %267 = vperm.xlu0 %266, %v243
        %v268 = vpop.permute.xlu0 %267
        %269 = vset.pattern.permute.xlu0 0
        %270 = vperm.xlu0 %269, %v244
        %v271 = vpop.permute.xlu0 %270
        %272 = vset.pattern.permute.xlu0 0
        %273 = vperm.xlu0 %272, %v245
        %v274 = vpop.permute.xlu0 %273
        %275 = vset.pattern.permute.xlu0 0
        %276 = vperm.xlu0 %275, %v246
        %v277 = vpop.permute.xlu0 %276
        %278 = vset.pattern.permute.xlu0 0
        %279 = vperm.xlu0 %278, %v247
        %v280 = vpop.permute.xlu0 %279
        %281 = vset.pattern.permute.xlu0 0
        %282 = vperm.xlu0 %281, %v248
        %v283 = vpop.permute.xlu0 %282
        %284 = vset.pattern.permute.xlu0 0
        %285 = vperm.xlu0 %284, %v249
        %v286 = vpop.permute.xlu0 %285
        %287 = vset.pattern.permute.xlu0 0
        %288 = vperm.xlu0 %287, %v250
        %v289 = vpop.permute.xlu0 %288
        %290 = vset.pattern.permute.xlu0 0
        %291 = vperm.xlu0 %290, %v251
        %v292 = vpop.permute.xlu0 %291
        %293 = vset.pattern.permute.xlu0 0
        %294 = vperm.xlu0 %293, %v252
        %v295 = vpop.permute.xlu0 %294
        %296 = vset.pattern.permute.xlu0 0
        %297 = vperm.xlu0 %296, %v253
        %v298 = vpop.permute.xlu0 %297
        %299 = vset.pattern.permute.xlu0 0
        %300 = vperm.xlu0 %299, %v254
        %v301 = vpop.permute.xlu0 %300
        %302 = vset.pattern.permute.xlu0 0
        %303 = vperm.xlu0 %302, %v255
        %v304 = vpop.permute.xlu0 %303
        %305 = vset.pattern.permute.xlu0 0
        %306 = vperm.xlu0 %305, %v256
        %v307 = vpop.permute.xlu0 %306
        %308 = vset.pattern.permute.xlu0 0
        %309 = vperm.xlu0 %308, %v257
        %v310 = vpop.permute.xlu0 %309
        %vm311 = vcmp.eq.s32.totalorder %v259, %v265
        %vm312 = vcmp.eq.s32.totalorder %v260, %v265
        %vm313 = vcmp.eq.s32.totalorder %v261, %v265
        %vm314 = vcmp.eq.s32.totalorder %v262, %v265
        %vm315 = vcmp.eq.s32.totalorder %v259, %v268
        %vm316 = vcmp.eq.s32.totalorder %v260, %v268
        %vm317 = vcmp.eq.s32.totalorder %v261, %v268
        %vm318 = vcmp.eq.s32.totalorder %v262, %v268
        %vm319 = vcmp.eq.s32.totalorder %v259, %v271
        %vm320 = vcmp.eq.s32.totalorder %v260, %v271
        %vm321 = vcmp.eq.s32.totalorder %v261, %v271
        %vm322 = vcmp.eq.s32.totalorder %v262, %v271
        %vm323 = vcmp.eq.s32.totalorder %v259, %v274
        %vm324 = vcmp.eq.s32.totalorder %v260, %v274
        %vm325 = vcmp.eq.s32.totalorder %v261, %v274
        %vm326 = vcmp.eq.s32.totalorder %v262, %v274
        %vm327 = vcmp.eq.s32.totalorder %v259, %v277
        %vm328 = vcmp.eq.s32.totalorder %v260, %v277
        %vm329 = vcmp.eq.s32.totalorder %v261, %v277
        %vm330 = vcmp.eq.s32.totalorder %v262, %v277
        %vm331 = vcmp.eq.s32.totalorder %v259, %v280
        %vm332 = vcmp.eq.s32.totalorder %v260, %v280
        %vm333 = vcmp.eq.s32.totalorder %v261, %v280
        %vm334 = vcmp.eq.s32.totalorder %v262, %v280
        %vm335 = vcmp.eq.s32.totalorder %v259, %v283
        %vm336 = vcmp.eq.s32.totalorder %v260, %v283
        %vm337 = vcmp.eq.s32.totalorder %v261, %v283
        %vm338 = vcmp.eq.s32.totalorder %v262, %v283
        %vm339 = vcmp.eq.s32.totalorder %v259, %v286
        %vm340 = vcmp.eq.s32.totalorder %v260, %v286
        %vm341 = vcmp.eq.s32.totalorder %v261, %v286
        %vm342 = vcmp.eq.s32.totalorder %v262, %v286
        %vm343 = vcmp.eq.s32.totalorder %v259, %v289
        %vm344 = vcmp.eq.s32.totalorder %v260, %v289
        %vm345 = vcmp.eq.s32.totalorder %v261, %v289
        %vm346 = vcmp.eq.s32.totalorder %v262, %v289
        %vm347 = vcmp.eq.s32.totalorder %v259, %v292
        %vm348 = vcmp.eq.s32.totalorder %v260, %v292
        %vm349 = vcmp.eq.s32.totalorder %v261, %v292
        %vm350 = vcmp.eq.s32.totalorder %v262, %v292
        %vm351 = vcmp.eq.s32.totalorder %v259, %v295
        %vm352 = vcmp.eq.s32.totalorder %v260, %v295
        %vm353 = vcmp.eq.s32.totalorder %v261, %v295
        %vm354 = vcmp.eq.s32.totalorder %v262, %v295
        %vm355 = vcmp.eq.s32.totalorder %v259, %v298
        %vm356 = vcmp.eq.s32.totalorder %v260, %v298
        %vm357 = vcmp.eq.s32.totalorder %v261, %v298
        %vm358 = vcmp.eq.s32.totalorder %v262, %v298
        %vm359 = vcmp.eq.s32.totalorder %v259, %v301
        %vm360 = vcmp.eq.s32.totalorder %v260, %v301
        %vm361 = vcmp.eq.s32.totalorder %v261, %v301
        %vm362 = vcmp.eq.s32.totalorder %v262, %v301
        %vm363 = vcmp.eq.s32.totalorder %v259, %v304
        %vm364 = vcmp.eq.s32.totalorder %v260, %v304
        %vm365 = vcmp.eq.s32.totalorder %v261, %v304
        %vm366 = vcmp.eq.s32.totalorder %v262, %v304
        %vm367 = vcmp.eq.s32.totalorder %v259, %v307
        %vm368 = vcmp.eq.s32.totalorder %v260, %v307
        %vm369 = vcmp.eq.s32.totalorder %v261, %v307
        %vm370 = vcmp.eq.s32.totalorder %v262, %v307
        %vm371 = vcmp.eq.s32.totalorder %v259, %v310
        %vm372 = vcmp.eq.s32.totalorder %v260, %v310
        %vm373 = vcmp.eq.s32.totalorder %v261, %v310
        %vm374 = vcmp.eq.s32.totalorder %v262, %v310
        %375 = vset.pattern.permute.xlu0 1
        %376 = vperm.xlu0 %375, %v242
        %v377 = vpop.permute.xlu0 %376
        %378 = vset.pattern.permute.xlu0 1
        %379 = vperm.xlu0 %378, %v243
        %v380 = vpop.permute.xlu0 %379
        %381 = vset.pattern.permute.xlu0 1
        %382 = vperm.xlu0 %381, %v244
        %v383 = vpop.permute.xlu0 %382
        %384 = vset.pattern.permute.xlu0 1
        %385 = vperm.xlu0 %384, %v245
        %v386 = vpop.permute.xlu0 %385
        %387 = vset.pattern.permute.xlu0 1
        %388 = vperm.xlu0 %387, %v246
        %v389 = vpop.permute.xlu0 %388
        %390 = vset.pattern.permute.xlu0 1
        %391 = vperm.xlu0 %390, %v247
        %v392 = vpop.permute.xlu0 %391
        %393 = vset.pattern.permute.xlu0 1
        %394 = vperm.xlu0 %393, %v248
        %v395 = vpop.permute.xlu0 %394
        %396 = vset.pattern.permute.xlu0 1
        %397 = vperm.xlu0 %396, %v249
        %v398 = vpop.permute.xlu0 %397
        %399 = vset.pattern.permute.xlu0 1
        %400 = vperm.xlu0 %399, %v250
        %v401 = vpop.permute.xlu0 %400
        %402 = vset.pattern.permute.xlu0 1
        %403 = vperm.xlu0 %402, %v251
        %v404 = vpop.permute.xlu0 %403
        %405 = vset.pattern.permute.xlu0 1
        %406 = vperm.xlu0 %405, %v252
        %v407 = vpop.permute.xlu0 %406
        %408 = vset.pattern.permute.xlu0 1
        %409 = vperm.xlu0 %408, %v253
        %v410 = vpop.permute.xlu0 %409
        %411 = vset.pattern.permute.xlu0 1
        %412 = vperm.xlu0 %411, %v254
        %v413 = vpop.permute.xlu0 %412
        %414 = vset.pattern.permute.xlu0 1
        %415 = vperm.xlu0 %414, %v255
        %v416 = vpop.permute.xlu0 %415
        %417 = vset.pattern.permute.xlu0 1
        %418 = vperm.xlu0 %417, %v256
        %v419 = vpop.permute.xlu0 %418
        %420 = vset.pattern.permute.xlu0 1
        %421 = vperm.xlu0 %420, %v257
        %v422 = vpop.permute.xlu0 %421
        %vm423 = vcmp.eq.s32.totalorder %v259, %v377
        %vm424 = vcmp.eq.s32.totalorder %v260, %v377
        %vm425 = vcmp.eq.s32.totalorder %v261, %v377
        %vm426 = vcmp.eq.s32.totalorder %v262, %v377
        %vm427 = vcmp.eq.s32.totalorder %v259, %v380
        %vm428 = vcmp.eq.s32.totalorder %v260, %v380
        %vm429 = vcmp.eq.s32.totalorder %v261, %v380
        %vm430 = vcmp.eq.s32.totalorder %v262, %v380
        %vm431 = vcmp.eq.s32.totalorder %v259, %v383
        %vm432 = vcmp.eq.s32.totalorder %v260, %v383
        %vm433 = vcmp.eq.s32.totalorder %v261, %v383
        %vm434 = vcmp.eq.s32.totalorder %v262, %v383
        %vm435 = vcmp.eq.s32.totalorder %v259, %v386
        %vm436 = vcmp.eq.s32.totalorder %v260, %v386
        %vm437 = vcmp.eq.s32.totalorder %v261, %v386
        %vm438 = vcmp.eq.s32.totalorder %v262, %v386
        %vm439 = vcmp.eq.s32.totalorder %v259, %v389
        %vm440 = vcmp.eq.s32.totalorder %v260, %v389
        %vm441 = vcmp.eq.s32.totalorder %v261, %v389
        %vm442 = vcmp.eq.s32.totalorder %v262, %v389
        %vm443 = vcmp.eq.s32.totalorder %v259, %v392
        %vm444 = vcmp.eq.s32.totalorder %v260, %v392
        %vm445 = vcmp.eq.s32.totalorder %v261, %v392
        %vm446 = vcmp.eq.s32.totalorder %v262, %v392
        %vm447 = vcmp.eq.s32.totalorder %v259, %v395
        %vm448 = vcmp.eq.s32.totalorder %v260, %v395
        %vm449 = vcmp.eq.s32.totalorder %v261, %v395
        %vm450 = vcmp.eq.s32.totalorder %v262, %v395
        %vm451 = vcmp.eq.s32.totalorder %v259, %v398
        %vm452 = vcmp.eq.s32.totalorder %v260, %v398
        %vm453 = vcmp.eq.s32.totalorder %v261, %v398
        %vm454 = vcmp.eq.s32.totalorder %v262, %v398
        %vm455 = vcmp.eq.s32.totalorder %v259, %v401
        %vm456 = vcmp.eq.s32.totalorder %v260, %v401
        %vm457 = vcmp.eq.s32.totalorder %v261, %v401
        %vm458 = vcmp.eq.s32.totalorder %v262, %v401
        %vm459 = vcmp.eq.s32.totalorder %v259, %v404
        %vm460 = vcmp.eq.s32.totalorder %v260, %v404
        %vm461 = vcmp.eq.s32.totalorder %v261, %v404
        %vm462 = vcmp.eq.s32.totalorder %v262, %v404
        %vm463 = vcmp.eq.s32.totalorder %v259, %v407
        %vm464 = vcmp.eq.s32.totalorder %v260, %v407
        %vm465 = vcmp.eq.s32.totalorder %v261, %v407
        %vm466 = vcmp.eq.s32.totalorder %v262, %v407
        %vm467 = vcmp.eq.s32.totalorder %v259, %v410
        %vm468 = vcmp.eq.s32.totalorder %v260, %v410
        %vm469 = vcmp.eq.s32.totalorder %v261, %v410
        %vm470 = vcmp.eq.s32.totalorder %v262, %v410
        %vm471 = vcmp.eq.s32.totalorder %v259, %v413
        %vm472 = vcmp.eq.s32.totalorder %v260, %v413
        %vm473 = vcmp.eq.s32.totalorder %v261, %v413
        %vm474 = vcmp.eq.s32.totalorder %v262, %v413
        %vm475 = vcmp.eq.s32.totalorder %v259, %v416
        %vm476 = vcmp.eq.s32.totalorder %v260, %v416
        %vm477 = vcmp.eq.s32.totalorder %v261, %v416
        %vm478 = vcmp.eq.s32.totalorder %v262, %v416
        %vm479 = vcmp.eq.s32.totalorder %v259, %v419
        %vm480 = vcmp.eq.s32.totalorder %v260, %v419
        %vm481 = vcmp.eq.s32.totalorder %v261, %v419
        %vm482 = vcmp.eq.s32.totalorder %v262, %v419
        %vm483 = vcmp.eq.s32.totalorder %v259, %v422
        %vm484 = vcmp.eq.s32.totalorder %v260, %v422
        %vm485 = vcmp.eq.s32.totalorder %v261, %v422
        %vm486 = vcmp.eq.s32.totalorder %v262, %v422
        %vm487 = vmor %vm311, %vm423
        %vm488 = vmor %vm312, %vm424
        %vm489 = vmor %vm313, %vm425
        %vm490 = vmor %vm314, %vm426
        %vm491 = vmor %vm315, %vm427
        %vm492 = vmor %vm316, %vm428
        %vm493 = vmor %vm317, %vm429
        %vm494 = vmor %vm318, %vm430
        %vm495 = vmor %vm319, %vm431
        %vm496 = vmor %vm320, %vm432
        %vm497 = vmor %vm321, %vm433
        %vm498 = vmor %vm322, %vm434
        %vm499 = vmor %vm323, %vm435
        %vm500 = vmor %vm324, %vm436
        %vm501 = vmor %vm325, %vm437
        %vm502 = vmor %vm326, %vm438
        %vm503 = vmor %vm327, %vm439
        %vm504 = vmor %vm328, %vm440
        %vm505 = vmor %vm329, %vm441
        %vm506 = vmor %vm330, %vm442
        %vm507 = vmor %vm331, %vm443
        %vm508 = vmor %vm332, %vm444
        %vm509 = vmor %vm333, %vm445
        %vm510 = vmor %vm334, %vm446
        %vm511 = vmor %vm335, %vm447
        %vm512 = vmor %vm336, %vm448
        %vm513 = vmor %vm337, %vm449
        %vm514 = vmor %vm338, %vm450
        %vm515 = vmor %vm339, %vm451
        %vm516 = vmor %vm340, %vm452
        %vm517 = vmor %vm341, %vm453
        %vm518 = vmor %vm342, %vm454
        %vm519 = vmor %vm343, %vm455
        %vm520 = vmor %vm344, %vm456
        %vm521 = vmor %vm345, %vm457
        %vm522 = vmor %vm346, %vm458
        %vm523 = vmor %vm347, %vm459
        %vm524 = vmor %vm348, %vm460
        %vm525 = vmor %vm349, %vm461
        %vm526 = vmor %vm350, %vm462
        %vm527 = vmor %vm351, %vm463
        %vm528 = vmor %vm352, %vm464
        %vm529 = vmor %vm353, %vm465
        %vm530 = vmor %vm354, %vm466
        %vm531 = vmor %vm355, %vm467
        %vm532 = vmor %vm356, %vm468
        %vm533 = vmor %vm357, %vm469
        %vm534 = vmor %vm358, %vm470
        %vm535 = vmor %vm359, %vm471
        %vm536 = vmor %vm360, %vm472
        %vm537 = vmor %vm361, %vm473
        %vm538 = vmor %vm362, %vm474
        %vm539 = vmor %vm363, %vm475
        %vm540 = vmor %vm364, %vm476
        %vm541 = vmor %vm365, %vm477
        %vm542 = vmor %vm366, %vm478
        %vm543 = vmor %vm367, %vm479
        %vm544 = vmor %vm368, %vm480
        %vm545 = vmor %vm369, %vm481
        %vm546 = vmor %vm370, %vm482
        %vm547 = vmor %vm371, %vm483
        %vm548 = vmor %vm372, %vm484
        %vm549 = vmor %vm373, %vm485
        %vm550 = vmor %vm374, %vm486
        %551 = vset.pattern.permute.xlu0 2
        %552 = vperm.xlu0 %551, %v242
        %v553 = vpop.permute.xlu0 %552
        %554 = vset.pattern.permute.xlu0 2
        %555 = vperm.xlu0 %554, %v243
        %v556 = vpop.permute.xlu0 %555
        %557 = vset.pattern.permute.xlu0 2
        %558 = vperm.xlu0 %557, %v244
        %v559 = vpop.permute.xlu0 %558
        %560 = vset.pattern.permute.xlu0 2
        %561 = vperm.xlu0 %560, %v245
        %v562 = vpop.permute.xlu0 %561
        %563 = vset.pattern.permute.xlu0 2
        %564 = vperm.xlu0 %563, %v246
        %v565 = vpop.permute.xlu0 %564
        %566 = vset.pattern.permute.xlu0 2
        %567 = vperm.xlu0 %566, %v247
        %v568 = vpop.permute.xlu0 %567
        %569 = vset.pattern.permute.xlu0 2
        %570 = vperm.xlu0 %569, %v248
        %v571 = vpop.permute.xlu0 %570
        %572 = vset.pattern.permute.xlu0 2
        %573 = vperm.xlu0 %572, %v249
        %v574 = vpop.permute.xlu0 %573
        %575 = vset.pattern.permute.xlu0 2
        %576 = vperm.xlu0 %575, %v250
        %v577 = vpop.permute.xlu0 %576
        %578 = vset.pattern.permute.xlu0 2
        %579 = vperm.xlu0 %578, %v251
        %v580 = vpop.permute.xlu0 %579
        %581 = vset.pattern.permute.xlu0 2
        %582 = vperm.xlu0 %581, %v252
        %v583 = vpop.permute.xlu0 %582
        %584 = vset.pattern.permute.xlu0 2
        %585 = vperm.xlu0 %584, %v253
        %v586 = vpop.permute.xlu0 %585
        %587 = vset.pattern.permute.xlu0 2
        %588 = vperm.xlu0 %587, %v254
        %v589 = vpop.permute.xlu0 %588
        %590 = vset.pattern.permute.xlu0 2
        %591 = vperm.xlu0 %590, %v255
        %v592 = vpop.permute.xlu0 %591
        %593 = vset.pattern.permute.xlu0 2
        %594 = vperm.xlu0 %593, %v256
        %v595 = vpop.permute.xlu0 %594
        %596 = vset.pattern.permute.xlu0 2
        %597 = vperm.xlu0 %596, %v257
        %v598 = vpop.permute.xlu0 %597
        %vm599 = vcmp.eq.s32.totalorder %v259, %v553
        %vm600 = vcmp.eq.s32.totalorder %v260, %v553
        %vm601 = vcmp.eq.s32.totalorder %v261, %v553
        %vm602 = vcmp.eq.s32.totalorder %v262, %v553
        %vm603 = vcmp.eq.s32.totalorder %v259, %v556
        %vm604 = vcmp.eq.s32.totalorder %v260, %v556
        %vm605 = vcmp.eq.s32.totalorder %v261, %v556
        %vm606 = vcmp.eq.s32.totalorder %v262, %v556
        %vm607 = vcmp.eq.s32.totalorder %v259, %v559
        %vm608 = vcmp.eq.s32.totalorder %v260, %v559
        %vm609 = vcmp.eq.s32.totalorder %v261, %v559
        %vm610 = vcmp.eq.s32.totalorder %v262, %v559
        %vm611 = vcmp.eq.s32.totalorder %v259, %v562
        %vm612 = vcmp.eq.s32.totalorder %v260, %v562
        %vm613 = vcmp.eq.s32.totalorder %v261, %v562
        %vm614 = vcmp.eq.s32.totalorder %v262, %v562
        %vm615 = vcmp.eq.s32.totalorder %v259, %v565
        %vm616 = vcmp.eq.s32.totalorder %v260, %v565
        %vm617 = vcmp.eq.s32.totalorder %v261, %v565
        %vm618 = vcmp.eq.s32.totalorder %v262, %v565
        %vm619 = vcmp.eq.s32.totalorder %v259, %v568
        %vm620 = vcmp.eq.s32.totalorder %v260, %v568
        %vm621 = vcmp.eq.s32.totalorder %v261, %v568
        %vm622 = vcmp.eq.s32.totalorder %v262, %v568
        %vm623 = vcmp.eq.s32.totalorder %v259, %v571
        %vm624 = vcmp.eq.s32.totalorder %v260, %v571
        %vm625 = vcmp.eq.s32.totalorder %v261, %v571
        %vm626 = vcmp.eq.s32.totalorder %v262, %v571
        %vm627 = vcmp.eq.s32.totalorder %v259, %v574
        %vm628 = vcmp.eq.s32.totalorder %v260, %v574
        %vm629 = vcmp.eq.s32.totalorder %v261, %v574
        %vm630 = vcmp.eq.s32.totalorder %v262, %v574
        %vm631 = vcmp.eq.s32.totalorder %v259, %v577
        %vm632 = vcmp.eq.s32.totalorder %v260, %v577
        %vm633 = vcmp.eq.s32.totalorder %v261, %v577
        %vm634 = vcmp.eq.s32.totalorder %v262, %v577
        %vm635 = vcmp.eq.s32.totalorder %v259, %v580
        %vm636 = vcmp.eq.s32.totalorder %v260, %v580
        %vm637 = vcmp.eq.s32.totalorder %v261, %v580
        %vm638 = vcmp.eq.s32.totalorder %v262, %v580
        %vm639 = vcmp.eq.s32.totalorder %v259, %v583
        %vm640 = vcmp.eq.s32.totalorder %v260, %v583
        %vm641 = vcmp.eq.s32.totalorder %v261, %v583
        %vm642 = vcmp.eq.s32.totalorder %v262, %v583
        %vm643 = vcmp.eq.s32.totalorder %v259, %v586
        %vm644 = vcmp.eq.s32.totalorder %v260, %v586
        %vm645 = vcmp.eq.s32.totalorder %v261, %v586
        %vm646 = vcmp.eq.s32.totalorder %v262, %v586
        %vm647 = vcmp.eq.s32.totalorder %v259, %v589
        %vm648 = vcmp.eq.s32.totalorder %v260, %v589
        %vm649 = vcmp.eq.s32.totalorder %v261, %v589
        %vm650 = vcmp.eq.s32.totalorder %v262, %v589
        %vm651 = vcmp.eq.s32.totalorder %v259, %v592
        %vm652 = vcmp.eq.s32.totalorder %v260, %v592
        %vm653 = vcmp.eq.s32.totalorder %v261, %v592
        %vm654 = vcmp.eq.s32.totalorder %v262, %v592
        %vm655 = vcmp.eq.s32.totalorder %v259, %v595
        %vm656 = vcmp.eq.s32.totalorder %v260, %v595
        %vm657 = vcmp.eq.s32.totalorder %v261, %v595
        %vm658 = vcmp.eq.s32.totalorder %v262, %v595
        %vm659 = vcmp.eq.s32.totalorder %v259, %v598
        %vm660 = vcmp.eq.s32.totalorder %v260, %v598
        %vm661 = vcmp.eq.s32.totalorder %v261, %v598
        %vm662 = vcmp.eq.s32.totalorder %v262, %v598
        %vm663 = vmor %vm487, %vm599
        %vm664 = vmor %vm488, %vm600
        %vm665 = vmor %vm489, %vm601
        %vm666 = vmor %vm490, %vm602
        %vm667 = vmor %vm491, %vm603
        %vm668 = vmor %vm492, %vm604
        %vm669 = vmor %vm493, %vm605
        %vm670 = vmor %vm494, %vm606
        %vm671 = vmor %vm495, %vm607
        %vm672 = vmor %vm496, %vm608
        %vm673 = vmor %vm497, %vm609
        %vm674 = vmor %vm498, %vm610
        %vm675 = vmor %vm499, %vm611
        %vm676 = vmor %vm500, %vm612
        %vm677 = vmor %vm501, %vm613
        %vm678 = vmor %vm502, %vm614
        %vm679 = vmor %vm503, %vm615
        %vm680 = vmor %vm504, %vm616
        %vm681 = vmor %vm505, %vm617
        %vm682 = vmor %vm506, %vm618
        %vm683 = vmor %vm507, %vm619
        %vm684 = vmor %vm508, %vm620
        %vm685 = vmor %vm509, %vm621
        %vm686 = vmor %vm510, %vm622
        %vm687 = vmor %vm511, %vm623
        %vm688 = vmor %vm512, %vm624
        %vm689 = vmor %vm513, %vm625
        %vm690 = vmor %vm514, %vm626
        %vm691 = vmor %vm515, %vm627
        %vm692 = vmor %vm516, %vm628
        %vm693 = vmor %vm517, %vm629
        %vm694 = vmor %vm518, %vm630
        %vm695 = vmor %vm519, %vm631
        %vm696 = vmor %vm520, %vm632
        %vm697 = vmor %vm521, %vm633
        %vm698 = vmor %vm522, %vm634
        %vm699 = vmor %vm523, %vm635
        %vm700 = vmor %vm524, %vm636
        %vm701 = vmor %vm525, %vm637
        %vm702 = vmor %vm526, %vm638
        %vm703 = vmor %vm527, %vm639
        %vm704 = vmor %vm528, %vm640
        %vm705 = vmor %vm529, %vm641
        %vm706 = vmor %vm530, %vm642
        %vm707 = vmor %vm531, %vm643
        %vm708 = vmor %vm532, %vm644
        %vm709 = vmor %vm533, %vm645
        %vm710 = vmor %vm534, %vm646
        %vm711 = vmor %vm535, %vm647
        %vm712 = vmor %vm536, %vm648
        %vm713 = vmor %vm537, %vm649
        %vm714 = vmor %vm538, %vm650
        %vm715 = vmor %vm539, %vm651
        %vm716 = vmor %vm540, %vm652
        %vm717 = vmor %vm541, %vm653
        %vm718 = vmor %vm542, %vm654
        %vm719 = vmor %vm543, %vm655
        %vm720 = vmor %vm544, %vm656
        %vm721 = vmor %vm545, %vm657
        %vm722 = vmor %vm546, %vm658
        %vm723 = vmor %vm547, %vm659
        %vm724 = vmor %vm548, %vm660
        %vm725 = vmor %vm549, %vm661
        %vm726 = vmor %vm550, %vm662
        %727 = vset.pattern.permute.xlu0 3
        %728 = vperm.xlu0 %727, %v242
        %v729 = vpop.permute.xlu0 %728
        %730 = vset.pattern.permute.xlu0 3
        %731 = vperm.xlu0 %730, %v243
        %v732 = vpop.permute.xlu0 %731
        %733 = vset.pattern.permute.xlu0 3
        %734 = vperm.xlu0 %733, %v244
        %v735 = vpop.permute.xlu0 %734
        %736 = vset.pattern.permute.xlu0 3
        %737 = vperm.xlu0 %736, %v245
        %v738 = vpop.permute.xlu0 %737
        %739 = vset.pattern.permute.xlu0 3
        %740 = vperm.xlu0 %739, %v246
        %v741 = vpop.permute.xlu0 %740
        %742 = vset.pattern.permute.xlu0 3
        %743 = vperm.xlu0 %742, %v247
        %v744 = vpop.permute.xlu0 %743
        %745 = vset.pattern.permute.xlu0 3
        %746 = vperm.xlu0 %745, %v248
        %v747 = vpop.permute.xlu0 %746
        %748 = vset.pattern.permute.xlu0 3
        %749 = vperm.xlu0 %748, %v249
        %v750 = vpop.permute.xlu0 %749
        %751 = vset.pattern.permute.xlu0 3
        %752 = vperm.xlu0 %751, %v250
        %v753 = vpop.permute.xlu0 %752
        %754 = vset.pattern.permute.xlu0 3
        %755 = vperm.xlu0 %754, %v251
        %v756 = vpop.permute.xlu0 %755
        %757 = vset.pattern.permute.xlu0 3
        %758 = vperm.xlu0 %757, %v252
        %v759 = vpop.permute.xlu0 %758
        %760 = vset.pattern.permute.xlu0 3
        %761 = vperm.xlu0 %760, %v253
        %v762 = vpop.permute.xlu0 %761
        %763 = vset.pattern.permute.xlu0 3
        %764 = vperm.xlu0 %763, %v254
        %v765 = vpop.permute.xlu0 %764
        %766 = vset.pattern.permute.xlu0 3
        %767 = vperm.xlu0 %766, %v255
        %v768 = vpop.permute.xlu0 %767
        %769 = vset.pattern.permute.xlu0 3
        %770 = vperm.xlu0 %769, %v256
        %v771 = vpop.permute.xlu0 %770
        %772 = vset.pattern.permute.xlu0 3
        %773 = vperm.xlu0 %772, %v257
        %v774 = vpop.permute.xlu0 %773
        %vm775 = vcmp.eq.s32.totalorder %v259, %v729
        %vm776 = vcmp.eq.s32.totalorder %v260, %v729
        %vm777 = vcmp.eq.s32.totalorder %v261, %v729
        %vm778 = vcmp.eq.s32.totalorder %v262, %v729
        %vm779 = vcmp.eq.s32.totalorder %v259, %v732
        %vm780 = vcmp.eq.s32.totalorder %v260, %v732
        %vm781 = vcmp.eq.s32.totalorder %v261, %v732
        %vm782 = vcmp.eq.s32.totalorder %v262, %v732
        %vm783 = vcmp.eq.s32.totalorder %v259, %v735
        %vm784 = vcmp.eq.s32.totalorder %v260, %v735
        %vm785 = vcmp.eq.s32.totalorder %v261, %v735
        %vm786 = vcmp.eq.s32.totalorder %v262, %v735
        %vm787 = vcmp.eq.s32.totalorder %v259, %v738
        %vm788 = vcmp.eq.s32.totalorder %v260, %v738
        %vm789 = vcmp.eq.s32.totalorder %v261, %v738
        %vm790 = vcmp.eq.s32.totalorder %v262, %v738
        %vm791 = vcmp.eq.s32.totalorder %v259, %v741
        %vm792 = vcmp.eq.s32.totalorder %v260, %v741
        %vm793 = vcmp.eq.s32.totalorder %v261, %v741
        %vm794 = vcmp.eq.s32.totalorder %v262, %v741
        %vm795 = vcmp.eq.s32.totalorder %v259, %v744
        %vm796 = vcmp.eq.s32.totalorder %v260, %v744
        %vm797 = vcmp.eq.s32.totalorder %v261, %v744
        %vm798 = vcmp.eq.s32.totalorder %v262, %v744
        %vm799 = vcmp.eq.s32.totalorder %v259, %v747
        %vm800 = vcmp.eq.s32.totalorder %v260, %v747
        %vm801 = vcmp.eq.s32.totalorder %v261, %v747
        %vm802 = vcmp.eq.s32.totalorder %v262, %v747
        %vm803 = vcmp.eq.s32.totalorder %v259, %v750
        %vm804 = vcmp.eq.s32.totalorder %v260, %v750
        %vm805 = vcmp.eq.s32.totalorder %v261, %v750
        %vm806 = vcmp.eq.s32.totalorder %v262, %v750
        %vm807 = vcmp.eq.s32.totalorder %v259, %v753
        %vm808 = vcmp.eq.s32.totalorder %v260, %v753
        %vm809 = vcmp.eq.s32.totalorder %v261, %v753
        %vm810 = vcmp.eq.s32.totalorder %v262, %v753
        %vm811 = vcmp.eq.s32.totalorder %v259, %v756
        %vm812 = vcmp.eq.s32.totalorder %v260, %v756
        %vm813 = vcmp.eq.s32.totalorder %v261, %v756
        %vm814 = vcmp.eq.s32.totalorder %v262, %v756
        %vm815 = vcmp.eq.s32.totalorder %v259, %v759
        %vm816 = vcmp.eq.s32.totalorder %v260, %v759
        %vm817 = vcmp.eq.s32.totalorder %v261, %v759
        %vm818 = vcmp.eq.s32.totalorder %v262, %v759
        %vm819 = vcmp.eq.s32.totalorder %v259, %v762
        %vm820 = vcmp.eq.s32.totalorder %v260, %v762
        %vm821 = vcmp.eq.s32.totalorder %v261, %v762
        %vm822 = vcmp.eq.s32.totalorder %v262, %v762
        %vm823 = vcmp.eq.s32.totalorder %v259, %v765
        %vm824 = vcmp.eq.s32.totalorder %v260, %v765
        %vm825 = vcmp.eq.s32.totalorder %v261, %v765
        %vm826 = vcmp.eq.s32.totalorder %v262, %v765
        %vm827 = vcmp.eq.s32.totalorder %v259, %v768
        %vm828 = vcmp.eq.s32.totalorder %v260, %v768
        %vm829 = vcmp.eq.s32.totalorder %v261, %v768
        %vm830 = vcmp.eq.s32.totalorder %v262, %v768
        %vm831 = vcmp.eq.s32.totalorder %v259, %v771
        %vm832 = vcmp.eq.s32.totalorder %v260, %v771
        %vm833 = vcmp.eq.s32.totalorder %v261, %v771
        %vm834 = vcmp.eq.s32.totalorder %v262, %v771
        %vm835 = vcmp.eq.s32.totalorder %v259, %v774
        %vm836 = vcmp.eq.s32.totalorder %v260, %v774
        %vm837 = vcmp.eq.s32.totalorder %v261, %v774
        %vm838 = vcmp.eq.s32.totalorder %v262, %v774
        %vm839 = vmor %vm663, %vm775
        %vm840 = vmor %vm664, %vm776
        %vm841 = vmor %vm665, %vm777
        %vm842 = vmor %vm666, %vm778
        %vm843 = vmor %vm667, %vm779
        %vm844 = vmor %vm668, %vm780
        %vm845 = vmor %vm669, %vm781
        %vm846 = vmor %vm670, %vm782
        %vm847 = vmor %vm671, %vm783
        %vm848 = vmor %vm672, %vm784
        %vm849 = vmor %vm673, %vm785
        %vm850 = vmor %vm674, %vm786
        %vm851 = vmor %vm675, %vm787
        %vm852 = vmor %vm676, %vm788
        %vm853 = vmor %vm677, %vm789
        %vm854 = vmor %vm678, %vm790
        %vm855 = vmor %vm679, %vm791
        %vm856 = vmor %vm680, %vm792
        %vm857 = vmor %vm681, %vm793
        %vm858 = vmor %vm682, %vm794
        %vm859 = vmor %vm683, %vm795
        %vm860 = vmor %vm684, %vm796
        %vm861 = vmor %vm685, %vm797
        %vm862 = vmor %vm686, %vm798
        %vm863 = vmor %vm687, %vm799
        %vm864 = vmor %vm688, %vm800
        %vm865 = vmor %vm689, %vm801
        %vm866 = vmor %vm690, %vm802
        %vm867 = vmor %vm691, %vm803
        %vm868 = vmor %vm692, %vm804
        %vm869 = vmor %vm693, %vm805
        %vm870 = vmor %vm694, %vm806
        %vm871 = vmor %vm695, %vm807
        %vm872 = vmor %vm696, %vm808
        %vm873 = vmor %vm697, %vm809
        %vm874 = vmor %vm698, %vm810
        %vm875 = vmor %vm699, %vm811
        %vm876 = vmor %vm700, %vm812
        %vm877 = vmor %vm701, %vm813
        %vm878 = vmor %vm702, %vm814
        %vm879 = vmor %vm703, %vm815
        %vm880 = vmor %vm704, %vm816
        %vm881 = vmor %vm705, %vm817
        %vm882 = vmor %vm706, %vm818
        %vm883 = vmor %vm707, %vm819
        %vm884 = vmor %vm708, %vm820
        %vm885 = vmor %vm709, %vm821
        %vm886 = vmor %vm710, %vm822
        %vm887 = vmor %vm711, %vm823
        %vm888 = vmor %vm712, %vm824
        %vm889 = vmor %vm713, %vm825
        %vm890 = vmor %vm714, %vm826
        %vm891 = vmor %vm715, %vm827
        %vm892 = vmor %vm716, %vm828
        %vm893 = vmor %vm717, %vm829
        %vm894 = vmor %vm718, %vm830
        %vm895 = vmor %vm719, %vm831
        %vm896 = vmor %vm720, %vm832
        %vm897 = vmor %vm721, %vm833
        %vm898 = vmor %vm722, %vm834
        %vm899 = vmor %vm723, %vm835
        %vm900 = vmor %vm724, %vm836
        %vm901 = vmor %vm725, %vm837
        %vm902 = vmor %vm726, %vm838
        %903 = vset.pattern.permute.xlu0 4
        %904 = vperm.xlu0 %903, %v242
        %v905 = vpop.permute.xlu0 %904
        %906 = vset.pattern.permute.xlu0 4
        %907 = vperm.xlu0 %906, %v243
        %v908 = vpop.permute.xlu0 %907
        %909 = vset.pattern.permute.xlu0 4
        %910 = vperm.xlu0 %909, %v244
        %v911 = vpop.permute.xlu0 %910
        %912 = vset.pattern.permute.xlu0 4
        %913 = vperm.xlu0 %912, %v245
        %v914 = vpop.permute.xlu0 %913
        %915 = vset.pattern.permute.xlu0 4
        %916 = vperm.xlu0 %915, %v246
        %v917 = vpop.permute.xlu0 %916
        %918 = vset.pattern.permute.xlu0 4
        %919 = vperm.xlu0 %918, %v247
        %v920 = vpop.permute.xlu0 %919
        %921 = vset.pattern.permute.xlu0 4
        %922 = vperm.xlu0 %921, %v248
        %v923 = vpop.permute.xlu0 %922
        %924 = vset.pattern.permute.xlu0 4
        %925 = vperm.xlu0 %924, %v249
        %v926 = vpop.permute.xlu0 %925
        %927 = vset.pattern.permute.xlu0 4
        %928 = vperm.xlu0 %927, %v250
        %v929 = vpop.permute.xlu0 %928
        %930 = vset.pattern.permute.xlu0 4
        %931 = vperm.xlu0 %930, %v251
        %v932 = vpop.permute.xlu0 %931
        %933 = vset.pattern.permute.xlu0 4
        %934 = vperm.xlu0 %933, %v252
        %v935 = vpop.permute.xlu0 %934
        %936 = vset.pattern.permute.xlu0 4
        %937 = vperm.xlu0 %936, %v253
        %v938 = vpop.permute.xlu0 %937
        %939 = vset.pattern.permute.xlu0 4
        %940 = vperm.xlu0 %939, %v254
        %v941 = vpop.permute.xlu0 %940
        %942 = vset.pattern.permute.xlu0 4
        %943 = vperm.xlu0 %942, %v255
        %v944 = vpop.permute.xlu0 %943
        %945 = vset.pattern.permute.xlu0 4
        %946 = vperm.xlu0 %945, %v256
        %v947 = vpop.permute.xlu0 %946
        %948 = vset.pattern.permute.xlu0 4
        %949 = vperm.xlu0 %948, %v257
        %v950 = vpop.permute.xlu0 %949
        %vm951 = vcmp.eq.s32.totalorder %v259, %v905
        %vm952 = vcmp.eq.s32.totalorder %v260, %v905
        %vm953 = vcmp.eq.s32.totalorder %v261, %v905
        %vm954 = vcmp.eq.s32.totalorder %v262, %v905
        %vm955 = vcmp.eq.s32.totalorder %v259, %v908
        %vm956 = vcmp.eq.s32.totalorder %v260, %v908
        %vm957 = vcmp.eq.s32.totalorder %v261, %v908
        %vm958 = vcmp.eq.s32.totalorder %v262, %v908
        %vm959 = vcmp.eq.s32.totalorder %v259, %v911
        %vm960 = vcmp.eq.s32.totalorder %v260, %v911
        %vm961 = vcmp.eq.s32.totalorder %v261, %v911
        %vm962 = vcmp.eq.s32.totalorder %v262, %v911
        %vm963 = vcmp.eq.s32.totalorder %v259, %v914
        %vm964 = vcmp.eq.s32.totalorder %v260, %v914
        %vm965 = vcmp.eq.s32.totalorder %v261, %v914
        %vm966 = vcmp.eq.s32.totalorder %v262, %v914
        %vm967 = vcmp.eq.s32.totalorder %v259, %v917
        %vm968 = vcmp.eq.s32.totalorder %v260, %v917
        %vm969 = vcmp.eq.s32.totalorder %v261, %v917
        %vm970 = vcmp.eq.s32.totalorder %v262, %v917
        %vm971 = vcmp.eq.s32.totalorder %v259, %v920
        %vm972 = vcmp.eq.s32.totalorder %v260, %v920
        %vm973 = vcmp.eq.s32.totalorder %v261, %v920
        %vm974 = vcmp.eq.s32.totalorder %v262, %v920
        %vm975 = vcmp.eq.s32.totalorder %v259, %v923
        %vm976 = vcmp.eq.s32.totalorder %v260, %v923
        %vm977 = vcmp.eq.s32.totalorder %v261, %v923
        %vm978 = vcmp.eq.s32.totalorder %v262, %v923
        %vm979 = vcmp.eq.s32.totalorder %v259, %v926
        %vm980 = vcmp.eq.s32.totalorder %v260, %v926
        %vm981 = vcmp.eq.s32.totalorder %v261, %v926
        %vm982 = vcmp.eq.s32.totalorder %v262, %v926
        %vm983 = vcmp.eq.s32.totalorder %v259, %v929
        %vm984 = vcmp.eq.s32.totalorder %v260, %v929
        %vm985 = vcmp.eq.s32.totalorder %v261, %v929
        %vm986 = vcmp.eq.s32.totalorder %v262, %v929
        %vm987 = vcmp.eq.s32.totalorder %v259, %v932
        %vm988 = vcmp.eq.s32.totalorder %v260, %v932
        %vm989 = vcmp.eq.s32.totalorder %v261, %v932
        %vm990 = vcmp.eq.s32.totalorder %v262, %v932
        %vm991 = vcmp.eq.s32.totalorder %v259, %v935
        %vm992 = vcmp.eq.s32.totalorder %v260, %v935
        %vm993 = vcmp.eq.s32.totalorder %v261, %v935
        %vm994 = vcmp.eq.s32.totalorder %v262, %v935
        %vm995 = vcmp.eq.s32.totalorder %v259, %v938
        %vm996 = vcmp.eq.s32.totalorder %v260, %v938
        %vm997 = vcmp.eq.s32.totalorder %v261, %v938
        %vm998 = vcmp.eq.s32.totalorder %v262, %v938
        %vm999 = vcmp.eq.s32.totalorder %v259, %v941
        %vm1000 = vcmp.eq.s32.totalorder %v260, %v941
        %vm1001 = vcmp.eq.s32.totalorder %v261, %v941
        %vm1002 = vcmp.eq.s32.totalorder %v262, %v941
        %vm1003 = vcmp.eq.s32.totalorder %v259, %v944
        %vm1004 = vcmp.eq.s32.totalorder %v260, %v944
        %vm1005 = vcmp.eq.s32.totalorder %v261, %v944
        %vm1006 = vcmp.eq.s32.totalorder %v262, %v944
        %vm1007 = vcmp.eq.s32.totalorder %v259, %v947
        %vm1008 = vcmp.eq.s32.totalorder %v260, %v947
        %vm1009 = vcmp.eq.s32.totalorder %v261, %v947
        %vm1010 = vcmp.eq.s32.totalorder %v262, %v947
        %vm1011 = vcmp.eq.s32.totalorder %v259, %v950
        %vm1012 = vcmp.eq.s32.totalorder %v260, %v950
        %vm1013 = vcmp.eq.s32.totalorder %v261, %v950
        %vm1014 = vcmp.eq.s32.totalorder %v262, %v950
        %vm1015 = vmor %vm839, %vm951
        %vm1016 = vmor %vm840, %vm952
        %vm1017 = vmor %vm841, %vm953
        %vm1018 = vmor %vm842, %vm954
        %vm1019 = vmor %vm843, %vm955
        %vm1020 = vmor %vm844, %vm956
        %vm1021 = vmor %vm845, %vm957
        %vm1022 = vmor %vm846, %vm958
        %vm1023 = vmor %vm847, %vm959
        %vm1024 = vmor %vm848, %vm960
        %vm1025 = vmor %vm849, %vm961
        %vm1026 = vmor %vm850, %vm962
        %vm1027 = vmor %vm851, %vm963
        %vm1028 = vmor %vm852, %vm964
        %vm1029 = vmor %vm853, %vm965
        %vm1030 = vmor %vm854, %vm966
        %vm1031 = vmor %vm855, %vm967
        %vm1032 = vmor %vm856, %vm968
        %vm1033 = vmor %vm857, %vm969
        %vm1034 = vmor %vm858, %vm970
        %vm1035 = vmor %vm859, %vm971
        %vm1036 = vmor %vm860, %vm972
        %vm1037 = vmor %vm861, %vm973
        %vm1038 = vmor %vm862, %vm974
        %vm1039 = vmor %vm863, %vm975
        %vm1040 = vmor %vm864, %vm976
        %vm1041 = vmor %vm865, %vm977
        %vm1042 = vmor %vm866, %vm978
        %vm1043 = vmor %vm867, %vm979
        %vm1044 = vmor %vm868, %vm980
        %vm1045 = vmor %vm869, %vm981
        %vm1046 = vmor %vm870, %vm982
        %vm1047 = vmor %vm871, %vm983
        %vm1048 = vmor %vm872, %vm984
        %vm1049 = vmor %vm873, %vm985
        %vm1050 = vmor %vm874, %vm986
        %vm1051 = vmor %vm875, %vm987
        %vm1052 = vmor %vm876, %vm988
        %vm1053 = vmor %vm877, %vm989
        %vm1054 = vmor %vm878, %vm990
        %vm1055 = vmor %vm879, %vm991
        %vm1056 = vmor %vm880, %vm992
        %vm1057 = vmor %vm881, %vm993
        %vm1058 = vmor %vm882, %vm994
        %vm1059 = vmor %vm883, %vm995
        %vm1060 = vmor %vm884, %vm996
        %vm1061 = vmor %vm885, %vm997
        %vm1062 = vmor %vm886, %vm998
        %vm1063 = vmor %vm887, %vm999
        %vm1064 = vmor %vm888, %vm1000
        %vm1065 = vmor %vm889, %vm1001
        %vm1066 = vmor %vm890, %vm1002
        %vm1067 = vmor %vm891, %vm1003
        %vm1068 = vmor %vm892, %vm1004
        %vm1069 = vmor %vm893, %vm1005
        %vm1070 = vmor %vm894, %vm1006
        %vm1071 = vmor %vm895, %vm1007
        %vm1072 = vmor %vm896, %vm1008
        %vm1073 = vmor %vm897, %vm1009
        %vm1074 = vmor %vm898, %vm1010
        %vm1075 = vmor %vm899, %vm1011
        %vm1076 = vmor %vm900, %vm1012
        %vm1077 = vmor %vm901, %vm1013
        %vm1078 = vmor %vm902, %vm1014
        %1079 = vset.pattern.permute.xlu0 5
        %1080 = vperm.xlu0 %1079, %v242
        %v1081 = vpop.permute.xlu0 %1080
        %1082 = vset.pattern.permute.xlu0 5
        %1083 = vperm.xlu0 %1082, %v243
        %v1084 = vpop.permute.xlu0 %1083
        %1085 = vset.pattern.permute.xlu0 5
        %1086 = vperm.xlu0 %1085, %v244
        %v1087 = vpop.permute.xlu0 %1086
        %1088 = vset.pattern.permute.xlu0 5
        %1089 = vperm.xlu0 %1088, %v245
        %v1090 = vpop.permute.xlu0 %1089
        %1091 = vset.pattern.permute.xlu0 5
        %1092 = vperm.xlu0 %1091, %v246
        %v1093 = vpop.permute.xlu0 %1092
        %1094 = vset.pattern.permute.xlu0 5
        %1095 = vperm.xlu0 %1094, %v247
        %v1096 = vpop.permute.xlu0 %1095
        %1097 = vset.pattern.permute.xlu0 5
        %1098 = vperm.xlu0 %1097, %v248
        %v1099 = vpop.permute.xlu0 %1098
        %1100 = vset.pattern.permute.xlu0 5
        %1101 = vperm.xlu0 %1100, %v249
        %v1102 = vpop.permute.xlu0 %1101
        %1103 = vset.pattern.permute.xlu0 5
        %1104 = vperm.xlu0 %1103, %v250
        %v1105 = vpop.permute.xlu0 %1104
        %1106 = vset.pattern.permute.xlu0 5
        %1107 = vperm.xlu0 %1106, %v251
        %v1108 = vpop.permute.xlu0 %1107
        %1109 = vset.pattern.permute.xlu0 5
        %1110 = vperm.xlu0 %1109, %v252
        %v1111 = vpop.permute.xlu0 %1110
        %1112 = vset.pattern.permute.xlu0 5
        %1113 = vperm.xlu0 %1112, %v253
        %v1114 = vpop.permute.xlu0 %1113
        %1115 = vset.pattern.permute.xlu0 5
        %1116 = vperm.xlu0 %1115, %v254
        %v1117 = vpop.permute.xlu0 %1116
        %1118 = vset.pattern.permute.xlu0 5
        %1119 = vperm.xlu0 %1118, %v255
        %v1120 = vpop.permute.xlu0 %1119
        %1121 = vset.pattern.permute.xlu0 5
        %1122 = vperm.xlu0 %1121, %v256
        %v1123 = vpop.permute.xlu0 %1122
        %1124 = vset.pattern.permute.xlu0 5
        %1125 = vperm.xlu0 %1124, %v257
        %v1126 = vpop.permute.xlu0 %1125
        %vm1127 = vcmp.eq.s32.totalorder %v259, %v1081
        %vm1128 = vcmp.eq.s32.totalorder %v260, %v1081
        %vm1129 = vcmp.eq.s32.totalorder %v261, %v1081
        %vm1130 = vcmp.eq.s32.totalorder %v262, %v1081
        %vm1131 = vcmp.eq.s32.totalorder %v259, %v1084
        %vm1132 = vcmp.eq.s32.totalorder %v260, %v1084
        %vm1133 = vcmp.eq.s32.totalorder %v261, %v1084
        %vm1134 = vcmp.eq.s32.totalorder %v262, %v1084
        %vm1135 = vcmp.eq.s32.totalorder %v259, %v1087
        %vm1136 = vcmp.eq.s32.totalorder %v260, %v1087
        %vm1137 = vcmp.eq.s32.totalorder %v261, %v1087
        %vm1138 = vcmp.eq.s32.totalorder %v262, %v1087
        %vm1139 = vcmp.eq.s32.totalorder %v259, %v1090
        %vm1140 = vcmp.eq.s32.totalorder %v260, %v1090
        %vm1141 = vcmp.eq.s32.totalorder %v261, %v1090
        %vm1142 = vcmp.eq.s32.totalorder %v262, %v1090
        %vm1143 = vcmp.eq.s32.totalorder %v259, %v1093
        %vm1144 = vcmp.eq.s32.totalorder %v260, %v1093
        %vm1145 = vcmp.eq.s32.totalorder %v261, %v1093
        %vm1146 = vcmp.eq.s32.totalorder %v262, %v1093
        %vm1147 = vcmp.eq.s32.totalorder %v259, %v1096
        %vm1148 = vcmp.eq.s32.totalorder %v260, %v1096
        %vm1149 = vcmp.eq.s32.totalorder %v261, %v1096
        %vm1150 = vcmp.eq.s32.totalorder %v262, %v1096
        %vm1151 = vcmp.eq.s32.totalorder %v259, %v1099
        %vm1152 = vcmp.eq.s32.totalorder %v260, %v1099
        %vm1153 = vcmp.eq.s32.totalorder %v261, %v1099
        %vm1154 = vcmp.eq.s32.totalorder %v262, %v1099
        %vm1155 = vcmp.eq.s32.totalorder %v259, %v1102
        %vm1156 = vcmp.eq.s32.totalorder %v260, %v1102
        %vm1157 = vcmp.eq.s32.totalorder %v261, %v1102
        %vm1158 = vcmp.eq.s32.totalorder %v262, %v1102
        %vm1159 = vcmp.eq.s32.totalorder %v259, %v1105
        %vm1160 = vcmp.eq.s32.totalorder %v260, %v1105
        %vm1161 = vcmp.eq.s32.totalorder %v261, %v1105
        %vm1162 = vcmp.eq.s32.totalorder %v262, %v1105
        %vm1163 = vcmp.eq.s32.totalorder %v259, %v1108
        %vm1164 = vcmp.eq.s32.totalorder %v260, %v1108
        %vm1165 = vcmp.eq.s32.totalorder %v261, %v1108
        %vm1166 = vcmp.eq.s32.totalorder %v262, %v1108
        %vm1167 = vcmp.eq.s32.totalorder %v259, %v1111
        %vm1168 = vcmp.eq.s32.totalorder %v260, %v1111
        %vm1169 = vcmp.eq.s32.totalorder %v261, %v1111
        %vm1170 = vcmp.eq.s32.totalorder %v262, %v1111
        %vm1171 = vcmp.eq.s32.totalorder %v259, %v1114
        %vm1172 = vcmp.eq.s32.totalorder %v260, %v1114
        %vm1173 = vcmp.eq.s32.totalorder %v261, %v1114
        %vm1174 = vcmp.eq.s32.totalorder %v262, %v1114
        %vm1175 = vcmp.eq.s32.totalorder %v259, %v1117
        %vm1176 = vcmp.eq.s32.totalorder %v260, %v1117
        %vm1177 = vcmp.eq.s32.totalorder %v261, %v1117
        %vm1178 = vcmp.eq.s32.totalorder %v262, %v1117
        %vm1179 = vcmp.eq.s32.totalorder %v259, %v1120
        %vm1180 = vcmp.eq.s32.totalorder %v260, %v1120
        %vm1181 = vcmp.eq.s32.totalorder %v261, %v1120
        %vm1182 = vcmp.eq.s32.totalorder %v262, %v1120
        %vm1183 = vcmp.eq.s32.totalorder %v259, %v1123
        %vm1184 = vcmp.eq.s32.totalorder %v260, %v1123
        %vm1185 = vcmp.eq.s32.totalorder %v261, %v1123
        %vm1186 = vcmp.eq.s32.totalorder %v262, %v1123
        %vm1187 = vcmp.eq.s32.totalorder %v259, %v1126
        %vm1188 = vcmp.eq.s32.totalorder %v260, %v1126
        %vm1189 = vcmp.eq.s32.totalorder %v261, %v1126
        %vm1190 = vcmp.eq.s32.totalorder %v262, %v1126
        %vm1191 = vmor %vm1015, %vm1127
        %vm1192 = vmor %vm1016, %vm1128
        %vm1193 = vmor %vm1017, %vm1129
        %vm1194 = vmor %vm1018, %vm1130
        %vm1195 = vmor %vm1019, %vm1131
        %vm1196 = vmor %vm1020, %vm1132
        %vm1197 = vmor %vm1021, %vm1133
        %vm1198 = vmor %vm1022, %vm1134
        %vm1199 = vmor %vm1023, %vm1135
        %vm1200 = vmor %vm1024, %vm1136
        %vm1201 = vmor %vm1025, %vm1137
        %vm1202 = vmor %vm1026, %vm1138
        %vm1203 = vmor %vm1027, %vm1139
        %vm1204 = vmor %vm1028, %vm1140
        %vm1205 = vmor %vm1029, %vm1141
        %vm1206 = vmor %vm1030, %vm1142
        %vm1207 = vmor %vm1031, %vm1143
        %vm1208 = vmor %vm1032, %vm1144
        %vm1209 = vmor %vm1033, %vm1145
        %vm1210 = vmor %vm1034, %vm1146
        %vm1211 = vmor %vm1035, %vm1147
        %vm1212 = vmor %vm1036, %vm1148
        %vm1213 = vmor %vm1037, %vm1149
        %vm1214 = vmor %vm1038, %vm1150
        %vm1215 = vmor %vm1039, %vm1151
        %vm1216 = vmor %vm1040, %vm1152
        %vm1217 = vmor %vm1041, %vm1153
        %vm1218 = vmor %vm1042, %vm1154
        %vm1219 = vmor %vm1043, %vm1155
        %vm1220 = vmor %vm1044, %vm1156
        %vm1221 = vmor %vm1045, %vm1157
        %vm1222 = vmor %vm1046, %vm1158
        %vm1223 = vmor %vm1047, %vm1159
        %vm1224 = vmor %vm1048, %vm1160
        %vm1225 = vmor %vm1049, %vm1161
        %vm1226 = vmor %vm1050, %vm1162
        %vm1227 = vmor %vm1051, %vm1163
        %vm1228 = vmor %vm1052, %vm1164
        %vm1229 = vmor %vm1053, %vm1165
        %vm1230 = vmor %vm1054, %vm1166
        %vm1231 = vmor %vm1055, %vm1167
        %vm1232 = vmor %vm1056, %vm1168
        %vm1233 = vmor %vm1057, %vm1169
        %vm1234 = vmor %vm1058, %vm1170
        %vm1235 = vmor %vm1059, %vm1171
        %vm1236 = vmor %vm1060, %vm1172
        %vm1237 = vmor %vm1061, %vm1173
        %vm1238 = vmor %vm1062, %vm1174
        %vm1239 = vmor %vm1063, %vm1175
        %vm1240 = vmor %vm1064, %vm1176
        %vm1241 = vmor %vm1065, %vm1177
        %vm1242 = vmor %vm1066, %vm1178
        %vm1243 = vmor %vm1067, %vm1179
        %vm1244 = vmor %vm1068, %vm1180
        %vm1245 = vmor %vm1069, %vm1181
        %vm1246 = vmor %vm1070, %vm1182
        %vm1247 = vmor %vm1071, %vm1183
        %vm1248 = vmor %vm1072, %vm1184
        %vm1249 = vmor %vm1073, %vm1185
        %vm1250 = vmor %vm1074, %vm1186
        %vm1251 = vmor %vm1075, %vm1187
        %vm1252 = vmor %vm1076, %vm1188
        %vm1253 = vmor %vm1077, %vm1189
        %vm1254 = vmor %vm1078, %vm1190
        %1255 = vset.pattern.permute.xlu0 6
        %1256 = vperm.xlu0 %1255, %v242
        %v1257 = vpop.permute.xlu0 %1256
        %1258 = vset.pattern.permute.xlu0 6
        %1259 = vperm.xlu0 %1258, %v243
        %v1260 = vpop.permute.xlu0 %1259
        %1261 = vset.pattern.permute.xlu0 6
        %1262 = vperm.xlu0 %1261, %v244
        %v1263 = vpop.permute.xlu0 %1262
        %1264 = vset.pattern.permute.xlu0 6
        %1265 = vperm.xlu0 %1264, %v245
        %v1266 = vpop.permute.xlu0 %1265
        %1267 = vset.pattern.permute.xlu0 6
        %1268 = vperm.xlu0 %1267, %v246
        %v1269 = vpop.permute.xlu0 %1268
        %1270 = vset.pattern.permute.xlu0 6
        %1271 = vperm.xlu0 %1270, %v247
        %v1272 = vpop.permute.xlu0 %1271
        %1273 = vset.pattern.permute.xlu0 6
        %1274 = vperm.xlu0 %1273, %v248
        %v1275 = vpop.permute.xlu0 %1274
        %1276 = vset.pattern.permute.xlu0 6
        %1277 = vperm.xlu0 %1276, %v249
        %v1278 = vpop.permute.xlu0 %1277
        %1279 = vset.pattern.permute.xlu0 6
        %1280 = vperm.xlu0 %1279, %v250
        %v1281 = vpop.permute.xlu0 %1280
        %1282 = vset.pattern.permute.xlu0 6
        %1283 = vperm.xlu0 %1282, %v251
        %v1284 = vpop.permute.xlu0 %1283
        %1285 = vset.pattern.permute.xlu0 6
        %1286 = vperm.xlu0 %1285, %v252
        %v1287 = vpop.permute.xlu0 %1286
        %1288 = vset.pattern.permute.xlu0 6
        %1289 = vperm.xlu0 %1288, %v253
        %v1290 = vpop.permute.xlu0 %1289
        %1291 = vset.pattern.permute.xlu0 6
        %1292 = vperm.xlu0 %1291, %v254
        %v1293 = vpop.permute.xlu0 %1292
        %1294 = vset.pattern.permute.xlu0 6
        %1295 = vperm.xlu0 %1294, %v255
        %v1296 = vpop.permute.xlu0 %1295
        %1297 = vset.pattern.permute.xlu0 6
        %1298 = vperm.xlu0 %1297, %v256
        %v1299 = vpop.permute.xlu0 %1298
        %1300 = vset.pattern.permute.xlu0 6
        %1301 = vperm.xlu0 %1300, %v257
        %v1302 = vpop.permute.xlu0 %1301
        %vm1303 = vcmp.eq.s32.totalorder %v259, %v1257
        %vm1304 = vcmp.eq.s32.totalorder %v260, %v1257
        %vm1305 = vcmp.eq.s32.totalorder %v261, %v1257
        %vm1306 = vcmp.eq.s32.totalorder %v262, %v1257
        %vm1307 = vcmp.eq.s32.totalorder %v259, %v1260
        %vm1308 = vcmp.eq.s32.totalorder %v260, %v1260
        %vm1309 = vcmp.eq.s32.totalorder %v261, %v1260
        %vm1310 = vcmp.eq.s32.totalorder %v262, %v1260
        %vm1311 = vcmp.eq.s32.totalorder %v259, %v1263
        %vm1312 = vcmp.eq.s32.totalorder %v260, %v1263
        %vm1313 = vcmp.eq.s32.totalorder %v261, %v1263
        %vm1314 = vcmp.eq.s32.totalorder %v262, %v1263
        %vm1315 = vcmp.eq.s32.totalorder %v259, %v1266
        %vm1316 = vcmp.eq.s32.totalorder %v260, %v1266
        %vm1317 = vcmp.eq.s32.totalorder %v261, %v1266
        %vm1318 = vcmp.eq.s32.totalorder %v262, %v1266
        %vm1319 = vcmp.eq.s32.totalorder %v259, %v1269
        %vm1320 = vcmp.eq.s32.totalorder %v260, %v1269
        %vm1321 = vcmp.eq.s32.totalorder %v261, %v1269
        %vm1322 = vcmp.eq.s32.totalorder %v262, %v1269
        %vm1323 = vcmp.eq.s32.totalorder %v259, %v1272
        %vm1324 = vcmp.eq.s32.totalorder %v260, %v1272
        %vm1325 = vcmp.eq.s32.totalorder %v261, %v1272
        %vm1326 = vcmp.eq.s32.totalorder %v262, %v1272
        %vm1327 = vcmp.eq.s32.totalorder %v259, %v1275
        %vm1328 = vcmp.eq.s32.totalorder %v260, %v1275
        %vm1329 = vcmp.eq.s32.totalorder %v261, %v1275
        %vm1330 = vcmp.eq.s32.totalorder %v262, %v1275
        %vm1331 = vcmp.eq.s32.totalorder %v259, %v1278
        %vm1332 = vcmp.eq.s32.totalorder %v260, %v1278
        %vm1333 = vcmp.eq.s32.totalorder %v261, %v1278
        %vm1334 = vcmp.eq.s32.totalorder %v262, %v1278
        %vm1335 = vcmp.eq.s32.totalorder %v259, %v1281
        %vm1336 = vcmp.eq.s32.totalorder %v260, %v1281
        %vm1337 = vcmp.eq.s32.totalorder %v261, %v1281
        %vm1338 = vcmp.eq.s32.totalorder %v262, %v1281
        %vm1339 = vcmp.eq.s32.totalorder %v259, %v1284
        %vm1340 = vcmp.eq.s32.totalorder %v260, %v1284
        %vm1341 = vcmp.eq.s32.totalorder %v261, %v1284
        %vm1342 = vcmp.eq.s32.totalorder %v262, %v1284
        %vm1343 = vcmp.eq.s32.totalorder %v259, %v1287
        %vm1344 = vcmp.eq.s32.totalorder %v260, %v1287
        %vm1345 = vcmp.eq.s32.totalorder %v261, %v1287
        %vm1346 = vcmp.eq.s32.totalorder %v262, %v1287
        %vm1347 = vcmp.eq.s32.totalorder %v259, %v1290
        %vm1348 = vcmp.eq.s32.totalorder %v260, %v1290
        %vm1349 = vcmp.eq.s32.totalorder %v261, %v1290
        %vm1350 = vcmp.eq.s32.totalorder %v262, %v1290
        %vm1351 = vcmp.eq.s32.totalorder %v259, %v1293
        %vm1352 = vcmp.eq.s32.totalorder %v260, %v1293
        %vm1353 = vcmp.eq.s32.totalorder %v261, %v1293
        %vm1354 = vcmp.eq.s32.totalorder %v262, %v1293
        %vm1355 = vcmp.eq.s32.totalorder %v259, %v1296
        %vm1356 = vcmp.eq.s32.totalorder %v260, %v1296
        %vm1357 = vcmp.eq.s32.totalorder %v261, %v1296
        %vm1358 = vcmp.eq.s32.totalorder %v262, %v1296
        %vm1359 = vcmp.eq.s32.totalorder %v259, %v1299
        %vm1360 = vcmp.eq.s32.totalorder %v260, %v1299
        %vm1361 = vcmp.eq.s32.totalorder %v261, %v1299
        %vm1362 = vcmp.eq.s32.totalorder %v262, %v1299
        %vm1363 = vcmp.eq.s32.totalorder %v259, %v1302
        %vm1364 = vcmp.eq.s32.totalorder %v260, %v1302
        %vm1365 = vcmp.eq.s32.totalorder %v261, %v1302
        %vm1366 = vcmp.eq.s32.totalorder %v262, %v1302
        %vm1367 = vmor %vm1191, %vm1303
        %vm1368 = vmor %vm1192, %vm1304
        %vm1369 = vmor %vm1193, %vm1305
        %vm1370 = vmor %vm1194, %vm1306
        %vm1371 = vmor %vm1195, %vm1307
        %vm1372 = vmor %vm1196, %vm1308
        %vm1373 = vmor %vm1197, %vm1309
        %vm1374 = vmor %vm1198, %vm1310
        %vm1375 = vmor %vm1199, %vm1311
        %vm1376 = vmor %vm1200, %vm1312
        %vm1377 = vmor %vm1201, %vm1313
        %vm1378 = vmor %vm1202, %vm1314
        %vm1379 = vmor %vm1203, %vm1315
        %vm1380 = vmor %vm1204, %vm1316
        %vm1381 = vmor %vm1205, %vm1317
        %vm1382 = vmor %vm1206, %vm1318
        %vm1383 = vmor %vm1207, %vm1319
        %vm1384 = vmor %vm1208, %vm1320
        %vm1385 = vmor %vm1209, %vm1321
        %vm1386 = vmor %vm1210, %vm1322
        %vm1387 = vmor %vm1211, %vm1323
        %vm1388 = vmor %vm1212, %vm1324
        %vm1389 = vmor %vm1213, %vm1325
        %vm1390 = vmor %vm1214, %vm1326
        %vm1391 = vmor %vm1215, %vm1327
        %vm1392 = vmor %vm1216, %vm1328
        %vm1393 = vmor %vm1217, %vm1329
        %vm1394 = vmor %vm1218, %vm1330
        %vm1395 = vmor %vm1219, %vm1331
        %vm1396 = vmor %vm1220, %vm1332
        %vm1397 = vmor %vm1221, %vm1333
        %vm1398 = vmor %vm1222, %vm1334
        %vm1399 = vmor %vm1223, %vm1335
        %vm1400 = vmor %vm1224, %vm1336
        %vm1401 = vmor %vm1225, %vm1337
        %vm1402 = vmor %vm1226, %vm1338
        %vm1403 = vmor %vm1227, %vm1339
        %vm1404 = vmor %vm1228, %vm1340
        %vm1405 = vmor %vm1229, %vm1341
        %vm1406 = vmor %vm1230, %vm1342
        %vm1407 = vmor %vm1231, %vm1343
        %vm1408 = vmor %vm1232, %vm1344
        %vm1409 = vmor %vm1233, %vm1345
        %vm1410 = vmor %vm1234, %vm1346
        %vm1411 = vmor %vm1235, %vm1347
        %vm1412 = vmor %vm1236, %vm1348
        %vm1413 = vmor %vm1237, %vm1349
        %vm1414 = vmor %vm1238, %vm1350
        %vm1415 = vmor %vm1239, %vm1351
        %vm1416 = vmor %vm1240, %vm1352
        %vm1417 = vmor %vm1241, %vm1353
        %vm1418 = vmor %vm1242, %vm1354
        %vm1419 = vmor %vm1243, %vm1355
        %vm1420 = vmor %vm1244, %vm1356
        %vm1421 = vmor %vm1245, %vm1357
        %vm1422 = vmor %vm1246, %vm1358
        %vm1423 = vmor %vm1247, %vm1359
        %vm1424 = vmor %vm1248, %vm1360
        %vm1425 = vmor %vm1249, %vm1361
        %vm1426 = vmor %vm1250, %vm1362
        %vm1427 = vmor %vm1251, %vm1363
        %vm1428 = vmor %vm1252, %vm1364
        %vm1429 = vmor %vm1253, %vm1365
        %vm1430 = vmor %vm1254, %vm1366
        %1431 = vset.pattern.permute.xlu0 7
        %1432 = vperm.xlu0 %1431, %v242
        %v1433 = vpop.permute.xlu0 %1432
        %1434 = vset.pattern.permute.xlu0 7
        %1435 = vperm.xlu0 %1434, %v243
        %v1436 = vpop.permute.xlu0 %1435
        %1437 = vset.pattern.permute.xlu0 7
        %1438 = vperm.xlu0 %1437, %v244
        %v1439 = vpop.permute.xlu0 %1438
        %1440 = vset.pattern.permute.xlu0 7
        %1441 = vperm.xlu0 %1440, %v245
        %v1442 = vpop.permute.xlu0 %1441
        %1443 = vset.pattern.permute.xlu0 7
        %1444 = vperm.xlu0 %1443, %v246
        %v1445 = vpop.permute.xlu0 %1444
        %1446 = vset.pattern.permute.xlu0 7
        %1447 = vperm.xlu0 %1446, %v247
        %v1448 = vpop.permute.xlu0 %1447
        %1449 = vset.pattern.permute.xlu0 7
        %1450 = vperm.xlu0 %1449, %v248
        %v1451 = vpop.permute.xlu0 %1450
        %1452 = vset.pattern.permute.xlu0 7
        %1453 = vperm.xlu0 %1452, %v249
        %v1454 = vpop.permute.xlu0 %1453
        %1455 = vset.pattern.permute.xlu0 7
        %1456 = vperm.xlu0 %1455, %v250
        %v1457 = vpop.permute.xlu0 %1456
        %1458 = vset.pattern.permute.xlu0 7
        %1459 = vperm.xlu0 %1458, %v251
        %v1460 = vpop.permute.xlu0 %1459
        %1461 = vset.pattern.permute.xlu0 7
        %1462 = vperm.xlu0 %1461, %v252
        %v1463 = vpop.permute.xlu0 %1462
        %1464 = vset.pattern.permute.xlu0 7
        %1465 = vperm.xlu0 %1464, %v253
        %v1466 = vpop.permute.xlu0 %1465
        %1467 = vset.pattern.permute.xlu0 7
        %1468 = vperm.xlu0 %1467, %v254
        %v1469 = vpop.permute.xlu0 %1468
        %1470 = vset.pattern.permute.xlu0 7
        %1471 = vperm.xlu0 %1470, %v255
        %v1472 = vpop.permute.xlu0 %1471
        %1473 = vset.pattern.permute.xlu0 7
        %1474 = vperm.xlu0 %1473, %v256
        %v1475 = vpop.permute.xlu0 %1474
        %1476 = vset.pattern.permute.xlu0 7
        %1477 = vperm.xlu0 %1476, %v257
        %v1478 = vpop.permute.xlu0 %1477
        %vm1479 = vcmp.eq.s32.totalorder %v259, %v1433
        %vm1480 = vcmp.eq.s32.totalorder %v260, %v1433
        %vm1481 = vcmp.eq.s32.totalorder %v261, %v1433
        %vm1482 = vcmp.eq.s32.totalorder %v262, %v1433
        %vm1483 = vcmp.eq.s32.totalorder %v259, %v1436
        %vm1484 = vcmp.eq.s32.totalorder %v260, %v1436
        %vm1485 = vcmp.eq.s32.totalorder %v261, %v1436
        %vm1486 = vcmp.eq.s32.totalorder %v262, %v1436
        %vm1487 = vcmp.eq.s32.totalorder %v259, %v1439
        %vm1488 = vcmp.eq.s32.totalorder %v260, %v1439
        %vm1489 = vcmp.eq.s32.totalorder %v261, %v1439
        %vm1490 = vcmp.eq.s32.totalorder %v262, %v1439
        %vm1491 = vcmp.eq.s32.totalorder %v259, %v1442
        %vm1492 = vcmp.eq.s32.totalorder %v260, %v1442
        %vm1493 = vcmp.eq.s32.totalorder %v261, %v1442
        %vm1494 = vcmp.eq.s32.totalorder %v262, %v1442
        %vm1495 = vcmp.eq.s32.totalorder %v259, %v1445
        %vm1496 = vcmp.eq.s32.totalorder %v260, %v1445
        %vm1497 = vcmp.eq.s32.totalorder %v261, %v1445
        %vm1498 = vcmp.eq.s32.totalorder %v262, %v1445
        %vm1499 = vcmp.eq.s32.totalorder %v259, %v1448
        %vm1500 = vcmp.eq.s32.totalorder %v260, %v1448
        %vm1501 = vcmp.eq.s32.totalorder %v261, %v1448
        %vm1502 = vcmp.eq.s32.totalorder %v262, %v1448
        %vm1503 = vcmp.eq.s32.totalorder %v259, %v1451
        %vm1504 = vcmp.eq.s32.totalorder %v260, %v1451
        %vm1505 = vcmp.eq.s32.totalorder %v261, %v1451
        %vm1506 = vcmp.eq.s32.totalorder %v262, %v1451
        %vm1507 = vcmp.eq.s32.totalorder %v259, %v1454
        %vm1508 = vcmp.eq.s32.totalorder %v260, %v1454
        %vm1509 = vcmp.eq.s32.totalorder %v261, %v1454
        %vm1510 = vcmp.eq.s32.totalorder %v262, %v1454
        %vm1511 = vcmp.eq.s32.totalorder %v259, %v1457
        %vm1512 = vcmp.eq.s32.totalorder %v260, %v1457
        %vm1513 = vcmp.eq.s32.totalorder %v261, %v1457
        %vm1514 = vcmp.eq.s32.totalorder %v262, %v1457
        %vm1515 = vcmp.eq.s32.totalorder %v259, %v1460
        %vm1516 = vcmp.eq.s32.totalorder %v260, %v1460
        %vm1517 = vcmp.eq.s32.totalorder %v261, %v1460
        %vm1518 = vcmp.eq.s32.totalorder %v262, %v1460
        %vm1519 = vcmp.eq.s32.totalorder %v259, %v1463
        %vm1520 = vcmp.eq.s32.totalorder %v260, %v1463
        %vm1521 = vcmp.eq.s32.totalorder %v261, %v1463
        %vm1522 = vcmp.eq.s32.totalorder %v262, %v1463
        %vm1523 = vcmp.eq.s32.totalorder %v259, %v1466
        %vm1524 = vcmp.eq.s32.totalorder %v260, %v1466
        %vm1525 = vcmp.eq.s32.totalorder %v261, %v1466
        %vm1526 = vcmp.eq.s32.totalorder %v262, %v1466
        %vm1527 = vcmp.eq.s32.totalorder %v259, %v1469
        %vm1528 = vcmp.eq.s32.totalorder %v260, %v1469
        %vm1529 = vcmp.eq.s32.totalorder %v261, %v1469
        %vm1530 = vcmp.eq.s32.totalorder %v262, %v1469
        %vm1531 = vcmp.eq.s32.totalorder %v259, %v1472
        %vm1532 = vcmp.eq.s32.totalorder %v260, %v1472
        %vm1533 = vcmp.eq.s32.totalorder %v261, %v1472
        %vm1534 = vcmp.eq.s32.totalorder %v262, %v1472
        %vm1535 = vcmp.eq.s32.totalorder %v259, %v1475
        %vm1536 = vcmp.eq.s32.totalorder %v260, %v1475
        %vm1537 = vcmp.eq.s32.totalorder %v261, %v1475
        %vm1538 = vcmp.eq.s32.totalorder %v262, %v1475
        %vm1539 = vcmp.eq.s32.totalorder %v259, %v1478
        %vm1540 = vcmp.eq.s32.totalorder %v260, %v1478
        %vm1541 = vcmp.eq.s32.totalorder %v261, %v1478
        %vm1542 = vcmp.eq.s32.totalorder %v262, %v1478
        %vm1543 = vmor %vm1367, %vm1479
        %vm1544 = vmor %vm1368, %vm1480
        %vm1545 = vmor %vm1369, %vm1481
        %vm1546 = vmor %vm1370, %vm1482
        %vm1547 = vmor %vm1371, %vm1483
        %vm1548 = vmor %vm1372, %vm1484
        %vm1549 = vmor %vm1373, %vm1485
        %vm1550 = vmor %vm1374, %vm1486
        %vm1551 = vmor %vm1375, %vm1487
        %vm1552 = vmor %vm1376, %vm1488
        %vm1553 = vmor %vm1377, %vm1489
        %vm1554 = vmor %vm1378, %vm1490
        %vm1555 = vmor %vm1379, %vm1491
        %vm1556 = vmor %vm1380, %vm1492
        %vm1557 = vmor %vm1381, %vm1493
        %vm1558 = vmor %vm1382, %vm1494
        %vm1559 = vmor %vm1383, %vm1495
        %vm1560 = vmor %vm1384, %vm1496
        %vm1561 = vmor %vm1385, %vm1497
        %vm1562 = vmor %vm1386, %vm1498
        %vm1563 = vmor %vm1387, %vm1499
        %vm1564 = vmor %vm1388, %vm1500
        %vm1565 = vmor %vm1389, %vm1501
        %vm1566 = vmor %vm1390, %vm1502
        %vm1567 = vmor %vm1391, %vm1503
        %vm1568 = vmor %vm1392, %vm1504
        %vm1569 = vmor %vm1393, %vm1505
        %vm1570 = vmor %vm1394, %vm1506
        %vm1571 = vmor %vm1395, %vm1507
        %vm1572 = vmor %vm1396, %vm1508
        %vm1573 = vmor %vm1397, %vm1509
        %vm1574 = vmor %vm1398, %vm1510
        %vm1575 = vmor %vm1399, %vm1511
        %vm1576 = vmor %vm1400, %vm1512
        %vm1577 = vmor %vm1401, %vm1513
        %vm1578 = vmor %vm1402, %vm1514
        %vm1579 = vmor %vm1403, %vm1515
        %vm1580 = vmor %vm1404, %vm1516
        %vm1581 = vmor %vm1405, %vm1517
        %vm1582 = vmor %vm1406, %vm1518
        %vm1583 = vmor %vm1407, %vm1519
        %vm1584 = vmor %vm1408, %vm1520
        %vm1585 = vmor %vm1409, %vm1521
        %vm1586 = vmor %vm1410, %vm1522
        %vm1587 = vmor %vm1411, %vm1523
        %vm1588 = vmor %vm1412, %vm1524
        %vm1589 = vmor %vm1413, %vm1525
        %vm1590 = vmor %vm1414, %vm1526
        %vm1591 = vmor %vm1415, %vm1527
        %vm1592 = vmor %vm1416, %vm1528
        %vm1593 = vmor %vm1417, %vm1529
        %vm1594 = vmor %vm1418, %vm1530
        %vm1595 = vmor %vm1419, %vm1531
        %vm1596 = vmor %vm1420, %vm1532
        %vm1597 = vmor %vm1421, %vm1533
        %vm1598 = vmor %vm1422, %vm1534
        %vm1599 = vmor %vm1423, %vm1535
        %vm1600 = vmor %vm1424, %vm1536
        %vm1601 = vmor %vm1425, %vm1537
        %vm1602 = vmor %vm1426, %vm1538
        %vm1603 = vmor %vm1427, %vm1539
        %vm1604 = vmor %vm1428, %vm1540
        %vm1605 = vmor %vm1429, %vm1541
        %vm1606 = vmor %vm1430, %vm1542
        %v1607 = vsel %vm1543, 1, 0
        %v1608 = vsel %vm1544, 1, 0
        %v1609 = vsel %vm1545, 1, 0
        %v1610 = vsel %vm1546, 1, 0
        %v1611 = vsel %vm1547, 1, 0
        %v1612 = vsel %vm1548, 1, 0
        %v1613 = vsel %vm1549, 1, 0
        %v1614 = vsel %vm1550, 1, 0
        %v1615 = vsel %vm1551, 1, 0
        %v1616 = vsel %vm1552, 1, 0
        %v1617 = vsel %vm1553, 1, 0
        %v1618 = vsel %vm1554, 1, 0
        %v1619 = vsel %vm1555, 1, 0
        %v1620 = vsel %vm1556, 1, 0
        %v1621 = vsel %vm1557, 1, 0
        %v1622 = vsel %vm1558, 1, 0
        %v1623 = vsel %vm1559, 1, 0
        %v1624 = vsel %vm1560, 1, 0
        %v1625 = vsel %vm1561, 1, 0
        %v1626 = vsel %vm1562, 1, 0
        %v1627 = vsel %vm1563, 1, 0
        %v1628 = vsel %vm1564, 1, 0
        %v1629 = vsel %vm1565, 1, 0
        %v1630 = vsel %vm1566, 1, 0
        %v1631 = vsel %vm1567, 1, 0
        %v1632 = vsel %vm1568, 1, 0
        %v1633 = vsel %vm1569, 1, 0
        %v1634 = vsel %vm1570, 1, 0
        %v1635 = vsel %vm1571, 1, 0
        %v1636 = vsel %vm1572, 1, 0
        %v1637 = vsel %vm1573, 1, 0
        %v1638 = vsel %vm1574, 1, 0
        %v1639 = vsel %vm1575, 1, 0
        %v1640 = vsel %vm1576, 1, 0
        %v1641 = vsel %vm1577, 1, 0
        %v1642 = vsel %vm1578, 1, 0
        %v1643 = vsel %vm1579, 1, 0
        %v1644 = vsel %vm1580, 1, 0
        %v1645 = vsel %vm1581, 1, 0
        %v1646 = vsel %vm1582, 1, 0
        %v1647 = vsel %vm1583, 1, 0
        %v1648 = vsel %vm1584, 1, 0
        %v1649 = vsel %vm1585, 1, 0
        %v1650 = vsel %vm1586, 1, 0
        %v1651 = vsel %vm1587, 1, 0
        %v1652 = vsel %vm1588, 1, 0
        %v1653 = vsel %vm1589, 1, 0
        %v1654 = vsel %vm1590, 1, 0
        %v1655 = vsel %vm1591, 1, 0
        %v1656 = vsel %vm1592, 1, 0
        %v1657 = vsel %vm1593, 1, 0
        %v1658 = vsel %vm1594, 1, 0
        %v1659 = vsel %vm1595, 1, 0
        %v1660 = vsel %vm1596, 1, 0
        %v1661 = vsel %vm1597, 1, 0
        %v1662 = vsel %vm1598, 1, 0
        %v1663 = vsel %vm1599, 1, 0
        %v1664 = vsel %vm1600, 1, 0
        %v1665 = vsel %vm1601, 1, 0
        %v1666 = vsel %vm1602, 1, 0
        %v1667 = vsel %vm1603, 1, 0
        %v1668 = vsel %vm1604, 1, 0
        %v1669 = vsel %vm1605, 1, 0
        %v1670 = vsel %vm1606, 1, 0
        %v1671 = vcvt.s32.f32 %v1607
        %v1672 = vcvt.s32.f32 %v1608
        %v1673 = vcvt.s32.f32 %v1609
        %v1674 = vcvt.s32.f32 %v1610
        %v1675 = vcvt.s32.f32 %v1611
        %v1676 = vcvt.s32.f32 %v1612
        %v1677 = vcvt.s32.f32 %v1613
        %v1678 = vcvt.s32.f32 %v1614
        %v1679 = vcvt.s32.f32 %v1615
        %v1680 = vcvt.s32.f32 %v1616
        %v1681 = vcvt.s32.f32 %v1617
        %v1682 = vcvt.s32.f32 %v1618
        %v1683 = vcvt.s32.f32 %v1619
        %v1684 = vcvt.s32.f32 %v1620
        %v1685 = vcvt.s32.f32 %v1621
        %v1686 = vcvt.s32.f32 %v1622
        %v1687 = vcvt.s32.f32 %v1623
        %v1688 = vcvt.s32.f32 %v1624
        %v1689 = vcvt.s32.f32 %v1625
        %v1690 = vcvt.s32.f32 %v1626
        %v1691 = vcvt.s32.f32 %v1627
        %v1692 = vcvt.s32.f32 %v1628
        %v1693 = vcvt.s32.f32 %v1629
        %v1694 = vcvt.s32.f32 %v1630
        %v1695 = vcvt.s32.f32 %v1631
        %v1696 = vcvt.s32.f32 %v1632
        %v1697 = vcvt.s32.f32 %v1633
        %v1698 = vcvt.s32.f32 %v1634
        %v1699 = vcvt.s32.f32 %v1635
        %v1700 = vcvt.s32.f32 %v1636
        %v1701 = vcvt.s32.f32 %v1637
        %v1702 = vcvt.s32.f32 %v1638
        %v1703 = vcvt.s32.f32 %v1639
        %v1704 = vcvt.s32.f32 %v1640
        %v1705 = vcvt.s32.f32 %v1641
        %v1706 = vcvt.s32.f32 %v1642
        %v1707 = vcvt.s32.f32 %v1643
        %v1708 = vcvt.s32.f32 %v1644
        %v1709 = vcvt.s32.f32 %v1645
        %v1710 = vcvt.s32.f32 %v1646
        %v1711 = vcvt.s32.f32 %v1647
        %v1712 = vcvt.s32.f32 %v1648
        %v1713 = vcvt.s32.f32 %v1649
        %v1714 = vcvt.s32.f32 %v1650
        %v1715 = vcvt.s32.f32 %v1651
        %v1716 = vcvt.s32.f32 %v1652
        %v1717 = vcvt.s32.f32 %v1653
        %v1718 = vcvt.s32.f32 %v1654
        %v1719 = vcvt.s32.f32 %v1655
        %v1720 = vcvt.s32.f32 %v1656
        %v1721 = vcvt.s32.f32 %v1657
        %v1722 = vcvt.s32.f32 %v1658
        %v1723 = vcvt.s32.f32 %v1659
        %v1724 = vcvt.s32.f32 %v1660
        %v1725 = vcvt.s32.f32 %v1661
        %v1726 = vcvt.s32.f32 %v1662
        %v1727 = vcvt.s32.f32 %v1663
        %v1728 = vcvt.s32.f32 %v1664
        %v1729 = vcvt.s32.f32 %v1665
        %v1730 = vcvt.s32.f32 %v1666
        %v1731 = vcvt.s32.f32 %v1667
        %v1732 = vcvt.s32.f32 %v1668
        %v1733 = vcvt.s32.f32 %v1669
        %v1734 = vcvt.s32.f32 %v1670
        %v1735 = vpack.c.bf16 %v1675, %v1671
        %v1736 = vpack.c.bf16 %v1676, %v1672
        %v1737 = vpack.c.bf16 %v1677, %v1673
        %v1738 = vpack.c.bf16 %v1678, %v1674
        %v1739 = vpack.c.bf16 %v1683, %v1679
        %v1740 = vpack.c.bf16 %v1684, %v1680
        %v1741 = vpack.c.bf16 %v1685, %v1681
        %v1742 = vpack.c.bf16 %v1686, %v1682
        %v1743 = vpack.c.bf16 %v1691, %v1687
        %v1744 = vpack.c.bf16 %v1692, %v1688
        %v1745 = vpack.c.bf16 %v1693, %v1689
        %v1746 = vpack.c.bf16 %v1694, %v1690
        %v1747 = vpack.c.bf16 %v1699, %v1695
        %v1748 = vpack.c.bf16 %v1700, %v1696
        %v1749 = vpack.c.bf16 %v1701, %v1697
        %v1750 = vpack.c.bf16 %v1702, %v1698
        %v1751 = vpack.c.bf16 %v1707, %v1703
        %v1752 = vpack.c.bf16 %v1708, %v1704
        %v1753 = vpack.c.bf16 %v1709, %v1705
        %v1754 = vpack.c.bf16 %v1710, %v1706
        %v1755 = vpack.c.bf16 %v1715, %v1711
        %v1756 = vpack.c.bf16 %v1716, %v1712
        %v1757 = vpack.c.bf16 %v1717, %v1713
        %v1758 = vpack.c.bf16 %v1718, %v1714
        %v1759 = vpack.c.bf16 %v1723, %v1719
        %v1760 = vpack.c.bf16 %v1724, %v1720
        %v1761 = vpack.c.bf16 %v1725, %v1721
        %v1762 = vpack.c.bf16 %v1726, %v1722
        %v1763 = vpack.c.bf16 %v1731, %v1727
        %v1764 = vpack.c.bf16 %v1732, %v1728
        %v1765 = vpack.c.bf16 %v1733, %v1729
        %v1766 = vpack.c.bf16 %v1734, %v1730
        %v1767 = vld [vmem:[%s1] sm:$0xf]
        %v1768 = vld [vmem:[%s1 + $0x4] sm:$0xf]
        %v1769 = vld [vmem:[%s1 + $0x8] sm:$0xf]
        %v1770 = vld [vmem:[%s1 + $0xc] sm:$0xf]
        %v1771 = vld [vmem:[%s1 + $0x10] sm:$0xf]
        %v1772 = vld [vmem:[%s1 + $0x14] sm:$0xf]
        %v1773 = vld [vmem:[%s1 + $0x18] sm:$0xf]
        %v1774 = vld [vmem:[%s1 + $0x1c] sm:$0xf]
        %v1775 = vld [vmem:[%s1 + $0x20] sm:$0xf]
        %v1776 = vld [vmem:[%s1 + $0x24] sm:$0xf]
        %v1777 = vld [vmem:[%s1 + $0x28] sm:$0xf]
        %v1778 = vld [vmem:[%s1 + $0x2c] sm:$0xf]
        %v1779 = vld [vmem:[%s1 + $0x30] sm:$0xf]
        %v1780 = vld [vmem:[%s1 + $0x34] sm:$0xf]
        %v1781 = vld [vmem:[%s1 + $0x38] sm:$0xf]
        %v1782 = vld [vmem:[%s1 + $0x3c] sm:$0xf]
        %v1783 = vld [vmem:[%s1 + $0x40] sm:$0xf]
        %v1784 = vld [vmem:[%s1 + $0x44] sm:$0xf]
        %v1785 = vld [vmem:[%s1 + $0x48] sm:$0xf]
        %v1786 = vld [vmem:[%s1 + $0x4c] sm:$0xf]
        %v1787 = vld [vmem:[%s1 + $0x50] sm:$0xf]
        %v1788 = vld [vmem:[%s1 + $0x54] sm:$0xf]
        %v1789 = vld [vmem:[%s1 + $0x58] sm:$0xf]
        %v1790 = vld [vmem:[%s1 + $0x5c] sm:$0xf]
        %v1791 = vld [vmem:[%s1 + $0x60] sm:$0xf]
        %v1792 = vld [vmem:[%s1 + $0x64] sm:$0xf]
        %v1793 = vld [vmem:[%s1 + $0x68] sm:$0xf]
        %v1794 = vld [vmem:[%s1 + $0x6c] sm:$0xf]
        %v1795 = vld [vmem:[%s1 + $0x70] sm:$0xf]
        %v1796 = vld [vmem:[%s1 + $0x74] sm:$0xf]
        %v1797 = vld [vmem:[%s1 + $0x78] sm:$0xf]
        %v1798 = vld [vmem:[%s1 + $0x7c] sm:$0xf]
        %v1799 = vld [vmem:[%s1 + $0x80] sm:$0xf]
        %v1800 = vld [vmem:[%s1 + $0x84] sm:$0xf]
        %v1801 = vld [vmem:[%s1 + $0x88] sm:$0xf]
        %v1802 = vld [vmem:[%s1 + $0x8c] sm:$0xf]
        %v1803 = vld [vmem:[%s1 + $0x90] sm:$0xf]
        %v1804 = vld [vmem:[%s1 + $0x94] sm:$0xf]
        %v1805 = vld [vmem:[%s1 + $0x98] sm:$0xf]
        %v1806 = vld [vmem:[%s1 + $0x9c] sm:$0xf]
        %v1807 = vld [vmem:[%s1 + $0xa0] sm:$0xf]
        %v1808 = vld [vmem:[%s1 + $0xa4] sm:$0xf]
        %v1809 = vld [vmem:[%s1 + $0xa8] sm:$0xf]
        %v1810 = vld [vmem:[%s1 + $0xac] sm:$0xf]
        %v1811 = vld [vmem:[%s1 + $0xb0] sm:$0xf]
        %v1812 = vld [vmem:[%s1 + $0xb4] sm:$0xf]
        %v1813 = vld [vmem:[%s1 + $0xb8] sm:$0xf]
        %v1814 = vld [vmem:[%s1 + $0xbc] sm:$0xf]
        %v1815 = vld [vmem:[%s1 + $0xc0] sm:$0xf]
        %v1816 = vld [vmem:[%s1 + $0xc4] sm:$0xf]
        %v1817 = vld [vmem:[%s1 + $0xc8] sm:$0xf]
        %v1818 = vld [vmem:[%s1 + $0xcc] sm:$0xf]
        %v1819 = vld [vmem:[%s1 + $0xd0] sm:$0xf]
        %v1820 = vld [vmem:[%s1 + $0xd4] sm:$0xf]
        %v1821 = vld [vmem:[%s1 + $0xd8] sm:$0xf]
        %v1822 = vld [vmem:[%s1 + $0xdc] sm:$0xf]
        %v1823 = vld [vmem:[%s1 + $0xe0] sm:$0xf]
        %v1824 = vld [vmem:[%s1 + $0xe4] sm:$0xf]
        %v1825 = vld [vmem:[%s1 + $0xe8] sm:$0xf]
        %v1826 = vld [vmem:[%s1 + $0xec] sm:$0xf]
        %v1827 = vld [vmem:[%s1 + $0xf0] sm:$0xf]
        %v1828 = vld [vmem:[%s1 + $0xf4] sm:$0xf]
        %v1829 = vld [vmem:[%s1 + $0xf8] sm:$0xf]
        %v1830 = vld [vmem:[%s1 + $0xfc] sm:$0xf]
        %v1831 = vld [vmem:[%s2] sm:$0x1]
        %v1833 = vlaneseq
        %v1834 = vshrl.u32 %v1833, 7
        %v1835 = vsub.s32 0, %v1834
        %v1836 = vrot.slane %v1831, %v1835
        %v1902 = vunpack.c.l.b16 %v1767
        %v1903 = vunpack.c.l.b16 %v1768
        %v1904 = vunpack.c.l.b16 %v1769
        %v1905 = vunpack.c.l.b16 %v1770
        %v1906 = vunpack.c.l.b16 %v1771
        %v1907 = vunpack.c.l.b16 %v1772
        %v1908 = vunpack.c.l.b16 %v1773
        %v1909 = vunpack.c.l.b16 %v1774
        %v1910 = vunpack.c.l.b16 %v1775
        %v1911 = vunpack.c.l.b16 %v1776
        %v1912 = vunpack.c.l.b16 %v1777
        %v1913 = vunpack.c.l.b16 %v1778
        %v1914 = vunpack.c.l.b16 %v1779
        %v1915 = vunpack.c.l.b16 %v1780
        %v1916 = vunpack.c.l.b16 %v1781
        %v1917 = vunpack.c.l.b16 %v1782
        %v1918 = vunpack.c.l.b16 %v1783
        %v1919 = vunpack.c.l.b16 %v1784
        %v1920 = vunpack.c.l.b16 %v1785
        %v1921 = vunpack.c.l.b16 %v1786
        %v1922 = vunpack.c.l.b16 %v1787
        %v1923 = vunpack.c.l.b16 %v1788
        %v1924 = vunpack.c.l.b16 %v1789
        %v1925 = vunpack.c.l.b16 %v1790
        %v1926 = vunpack.c.l.b16 %v1791
        %v1927 = vunpack.c.l.b16 %v1792
        %v1928 = vunpack.c.l.b16 %v1793
        %v1929 = vunpack.c.l.b16 %v1794
        %v1930 = vunpack.c.l.b16 %v1795
        %v1931 = vunpack.c.l.b16 %v1796
        %v1932 = vunpack.c.l.b16 %v1797
        %v1933 = vunpack.c.l.b16 %v1798
        %v1934 = vunpack.c.l.b16 %v1799
        %v1935 = vunpack.c.l.b16 %v1800
        %v1936 = vunpack.c.l.b16 %v1801
        %v1937 = vunpack.c.l.b16 %v1802
        %v1938 = vunpack.c.l.b16 %v1803
        %v1939 = vunpack.c.l.b16 %v1804
        %v1940 = vunpack.c.l.b16 %v1805
        %v1941 = vunpack.c.l.b16 %v1806
        %v1942 = vunpack.c.l.b16 %v1807
        %v1943 = vunpack.c.l.b16 %v1808
        %v1944 = vunpack.c.l.b16 %v1809
        %v1945 = vunpack.c.l.b16 %v1810
        %v1946 = vunpack.c.l.b16 %v1811
        %v1947 = vunpack.c.l.b16 %v1812
        %v1948 = vunpack.c.l.b16 %v1813
        %v1949 = vunpack.c.l.b16 %v1814
        %v1950 = vunpack.c.l.b16 %v1815
        %v1951 = vunpack.c.l.b16 %v1816
        %v1952 = vunpack.c.l.b16 %v1817
        %v1953 = vunpack.c.l.b16 %v1818
        %v1954 = vunpack.c.l.b16 %v1819
        %v1955 = vunpack.c.l.b16 %v1820
        %v1956 = vunpack.c.l.b16 %v1821
        %v1957 = vunpack.c.l.b16 %v1822
        %v1958 = vunpack.c.l.b16 %v1823
        %v1959 = vunpack.c.l.b16 %v1824
        %v1960 = vunpack.c.l.b16 %v1825
        %v1961 = vunpack.c.l.b16 %v1826
        %v1962 = vunpack.c.l.b16 %v1827
        %v1963 = vunpack.c.l.b16 %v1828
        %v1964 = vunpack.c.l.b16 %v1829
        %v1965 = vunpack.c.l.b16 %v1830
        %v1966 = vpack.c.b16 %v1903, %v1902
        %v1967 = vpack.c.b16 %v1905, %v1904
        %v1968 = vpack.c.b16 %v1907, %v1906
        %v1969 = vpack.c.b16 %v1909, %v1908
        %v1970 = vpack.c.b16 %v1911, %v1910
        %v1971 = vpack.c.b16 %v1913, %v1912
        %v1972 = vpack.c.b16 %v1915, %v1914
        %v1973 = vpack.c.b16 %v1917, %v1916
        %v1974 = vpack.c.b16 %v1919, %v1918
        %v1975 = vpack.c.b16 %v1921, %v1920
        %v1976 = vpack.c.b16 %v1923, %v1922
        %v1977 = vpack.c.b16 %v1925, %v1924
        %v1978 = vpack.c.b16 %v1927, %v1926
        %v1979 = vpack.c.b16 %v1929, %v1928
        %v1980 = vpack.c.b16 %v1931, %v1930
        %v1981 = vpack.c.b16 %v1933, %v1932
        %v1982 = vpack.c.b16 %v1935, %v1934
        %v1983 = vpack.c.b16 %v1937, %v1936
        %v1984 = vpack.c.b16 %v1939, %v1938
        %v1985 = vpack.c.b16 %v1941, %v1940
        %v1986 = vpack.c.b16 %v1943, %v1942
        %v1987 = vpack.c.b16 %v1945, %v1944
        %v1988 = vpack.c.b16 %v1947, %v1946
        %v1989 = vpack.c.b16 %v1949, %v1948
        %v1990 = vpack.c.b16 %v1951, %v1950
        %v1991 = vpack.c.b16 %v1953, %v1952
        %v1992 = vpack.c.b16 %v1955, %v1954
        %v1993 = vpack.c.b16 %v1957, %v1956
        %v1994 = vpack.c.b16 %v1959, %v1958
        %v1995 = vpack.c.b16 %v1961, %v1960
        %v1996 = vpack.c.b16 %v1963, %v1962
        %v1997 = vpack.c.b16 %v1965, %v1964
        %2030 = vmatprep.subr.bf16.mxu0 0
        %2031 = vmatpush1.bf16.msra.mxu0 %v1973
        %2032 = vmatprep.subr.bf16.mxu0 0
        %2033 = vmatpush1.bf16.msra.mxu0 %v1972
        %2034 = vmatprep.subr.bf16.mxu0 0
        %2035 = vmatpush1.bf16.msra.mxu0 %v1971
        %2036 = vmatprep.subr.bf16.mxu0 0
        %2037 = vmatpush1.bf16.msra.mxu0 %v1970
        %2038 = vmatprep.subr.bf16.mxu0 0
        %2039 = vmatpush1.bf16.msra.mxu0 %v1969
        %2040 = vmatprep.subr.bf16.mxu0 0
        %2041 = vmatpush1.bf16.msra.mxu0 %v1968
        %2042 = vmatprep.subr.bf16.mxu0 0
        %2043 = vmatpush1.bf16.msra.mxu0 %v1967
        %2044 = vmatprep.subr.bf16.mxu0 0
        %2045 = vmatpush1.bf16.msra.mxu0 %v1966
        %2046 = vmatprep.subr.bf16.mxu0 0
        %2047 = vmatpush2.bf16.msra.mxu0 %v1981
        %2048 = vmatprep.subr.bf16.mxu0 0
        %2049 = vmatpush2.bf16.msra.mxu0 %v1980
        %2050 = vmatprep.subr.bf16.mxu0 0
        %2051 = vmatpush2.bf16.msra.mxu0 %v1979
        %2052 = vmatprep.subr.bf16.mxu0 0
        %2053 = vmatpush2.bf16.msra.mxu0 %v1978
        %2054 = vmatprep.subr.bf16.mxu0 0
        %2055 = vmatpush2.bf16.msra.mxu0 %v1977
        %2056 = vmatprep.subr.bf16.mxu0 0
        %2057 = vmatpush2.bf16.msra.mxu0 %v1976
        %2058 = vmatprep.subr.bf16.mxu0 0
        %2059 = vmatpush2.bf16.msra.mxu0 %v1975
        %2060 = vmatprep.subr.bf16.mxu0 0
        %2061 = vmatpush2.bf16.msra.mxu0 %v1974
        %2062 = vmatprep.mubr.bf16.mxu0 %v1736
        %2063 = vmatmul.mubr.bf16.gmra.mxu0 %v1735
        %v2064 = vpop.f32.mrf.mxu0
        %v2065 = vadd.f32 %v1836, %v2064
        %v2066 = vpop.f32.mrf.mxu0
        %v2067 = vpop.f32.mrf.mxu0
        %v2068 = vadd.f32 %v1836, %v2067
        %v2069 = vpop.f32.mrf.mxu0
        %2070 = vmatprep.mubr.bf16.mxu0 %v1740
        %2071 = vmatmul.mubr.bf16.gmra.mxu0 %v1739
        %v2072 = vpop.f32.mrf.mxu0
        %v2073 = vadd.f32 %v1836, %v2072
        %v2074 = vpop.f32.mrf.mxu0
        %v2075 = vpop.f32.mrf.mxu0
        %v2076 = vadd.f32 %v1836, %v2075
        %v2077 = vpop.f32.mrf.mxu0
        %2078 = vmatprep.mubr.bf16.mxu0 %v1744
        %2079 = vmatmul.mubr.bf16.gmra.mxu0 %v1743
        %v2080 = vpop.f32.mrf.mxu0
        %v2081 = vadd.f32 %v1836, %v2080
        %v2082 = vpop.f32.mrf.mxu0
        %v2083 = vpop.f32.mrf.mxu0
        %v2084 = vadd.f32 %v1836, %v2083
        %v2085 = vpop.f32.mrf.mxu0
        %2086 = vmatprep.mubr.bf16.mxu0 %v1748
        %2087 = vmatmul.mubr.bf16.gmra.mxu0 %v1747
        %v2088 = vpop.f32.mrf.mxu0
        %v2089 = vadd.f32 %v1836, %v2088
        %v2090 = vpop.f32.mrf.mxu0
        %v2091 = vpop.f32.mrf.mxu0
        %v2092 = vadd.f32 %v1836, %v2091
        %v2093 = vpop.f32.mrf.mxu0
        %2094 = vmatprep.mubr.bf16.mxu0 %v1752
        %2095 = vmatmul.mubr.bf16.gmra.mxu0 %v1751
        %v2096 = vpop.f32.mrf.mxu0
        %v2097 = vadd.f32 %v1836, %v2096
        %v2098 = vpop.f32.mrf.mxu0
        %v2099 = vpop.f32.mrf.mxu0
        %v2100 = vadd.f32 %v1836, %v2099
        %v2101 = vpop.f32.mrf.mxu0
        %2102 = vmatprep.mubr.bf16.mxu0 %v1756
        %2103 = vmatmul.mubr.bf16.gmra.mxu0 %v1755
        %v2104 = vpop.f32.mrf.mxu0
        %v2105 = vadd.f32 %v1836, %v2104
        %v2106 = vpop.f32.mrf.mxu0
        %v2107 = vpop.f32.mrf.mxu0
        %v2108 = vadd.f32 %v1836, %v2107
        %v2109 = vpop.f32.mrf.mxu0
        %2110 = vmatprep.mubr.bf16.mxu0 %v1760
        %2111 = vmatmul.mubr.bf16.gmra.mxu0 %v1759
        %v2112 = vpop.f32.mrf.mxu0
        %v2113 = vadd.f32 %v1836, %v2112
        %v2114 = vpop.f32.mrf.mxu0
        %v2115 = vpop.f32.mrf.mxu0
        %v2116 = vadd.f32 %v1836, %v2115
        %v2117 = vpop.f32.mrf.mxu0
        %2118 = vmatprep.mubr.bf16.mxu0 %v1764
        %2119 = vmatmul.mubr.bf16.gmra.mxu0 %v1763
        %v2120 = vpop.f32.mrf.mxu0
        %v2121 = vadd.f32 %v1836, %v2120
        %v2122 = vpop.f32.mrf.mxu0
        %v2123 = vpop.f32.mrf.mxu0
        %v2124 = vadd.f32 %v1836, %v2123
        %v2125 = vpop.f32.mrf.mxu0
        %2126 = vdwg.mxu0
        %2127 = vmatprep.subr.bf16.mxu0 0
        %2128 = vmatpush1.bf16.msra.mxu0 %v1989
        %2129 = vmatprep.subr.bf16.mxu0 0
        %2130 = vmatpush1.bf16.msra.mxu0 %v1988
        %2131 = vmatprep.subr.bf16.mxu0 0
        %2132 = vmatpush1.bf16.msra.mxu0 %v1987
        %2133 = vmatprep.subr.bf16.mxu0 0
        %2134 = vmatpush1.bf16.msra.mxu0 %v1986
        %2135 = vmatprep.subr.bf16.mxu0 0
        %2136 = vmatpush1.bf16.msra.mxu0 %v1985
        %2137 = vmatprep.subr.bf16.mxu0 0
        %2138 = vmatpush1.bf16.msra.mxu0 %v1984
        %2139 = vmatprep.subr.bf16.mxu0 0
        %2140 = vmatpush1.bf16.msra.mxu0 %v1983
        %2141 = vmatprep.subr.bf16.mxu0 0
        %2142 = vmatpush1.bf16.msra.mxu0 %v1982
        %2143 = vmatprep.subr.bf16.mxu0 0
        %2144 = vmatpush2.bf16.msra.mxu0 %v1997
        %2145 = vmatprep.subr.bf16.mxu0 0
        %2146 = vmatpush2.bf16.msra.mxu0 %v1996
        %2147 = vmatprep.subr.bf16.mxu0 0
        %2148 = vmatpush2.bf16.msra.mxu0 %v1995
        %2149 = vmatprep.subr.bf16.mxu0 0
        %2150 = vmatpush2.bf16.msra.mxu0 %v1994
        %2151 = vmatprep.subr.bf16.mxu0 0
        %2152 = vmatpush2.bf16.msra.mxu0 %v1993
        %2153 = vmatprep.subr.bf16.mxu0 0
        %2154 = vmatpush2.bf16.msra.mxu0 %v1992
        %2155 = vmatprep.subr.bf16.mxu0 0
        %2156 = vmatpush2.bf16.msra.mxu0 %v1991
        %2157 = vmatprep.subr.bf16.mxu0 0
        %2158 = vmatpush2.bf16.msra.mxu0 %v1990
        %2159 = vmatprep.mubr.bf16.mxu0 %v1738
        %2160 = vmatmul.mubr.bf16.gmra.mxu0 %v1737
        %v2161 = vpop.f32.mrf.mxu0
        %v2162 = vadd.f32 %v2065, %v2161
        %v2163 = vpop.f32.mrf.mxu0
        %v2164 = vpop.f32.mrf.mxu0
        %v2165 = vadd.f32 %v2068, %v2164
        %v2166 = vpop.f32.mrf.mxu0
        %2167 = vmatprep.mubr.bf16.mxu0 %v1742
        %2168 = vmatmul.mubr.bf16.gmra.mxu0 %v1741
        %v2169 = vpop.f32.mrf.mxu0
        %v2170 = vadd.f32 %v2073, %v2169
        %v2171 = vpop.f32.mrf.mxu0
        %v2172 = vpop.f32.mrf.mxu0
        %v2173 = vadd.f32 %v2076, %v2172
        %v2174 = vpop.f32.mrf.mxu0
        %2175 = vmatprep.mubr.bf16.mxu0 %v1746
        %2176 = vmatmul.mubr.bf16.gmra.mxu0 %v1745
        %v2177 = vpop.f32.mrf.mxu0
        %v2178 = vadd.f32 %v2081, %v2177
        %v2179 = vpop.f32.mrf.mxu0
        %v2180 = vpop.f32.mrf.mxu0
        %v2181 = vadd.f32 %v2084, %v2180
        %v2182 = vpop.f32.mrf.mxu0
        %2183 = vmatprep.mubr.bf16.mxu0 %v1750
        %2184 = vmatmul.mubr.bf16.gmra.mxu0 %v1749
        %v2185 = vpop.f32.mrf.mxu0
        %v2186 = vadd.f32 %v2089, %v2185
        %v2187 = vpop.f32.mrf.mxu0
        %v2188 = vpop.f32.mrf.mxu0
        %v2189 = vadd.f32 %v2092, %v2188
        %v2190 = vpop.f32.mrf.mxu0
        %2191 = vmatprep.mubr.bf16.mxu0 %v1754
        %2192 = vmatmul.mubr.bf16.gmra.mxu0 %v1753
        %v2193 = vpop.f32.mrf.mxu0
        %v2194 = vadd.f32 %v2097, %v2193
        %v2195 = vpop.f32.mrf.mxu0
        %v2196 = vpop.f32.mrf.mxu0
        %v2197 = vadd.f32 %v2100, %v2196
        %v2198 = vpop.f32.mrf.mxu0
        %2199 = vmatprep.mubr.bf16.mxu0 %v1758
        %2200 = vmatmul.mubr.bf16.gmra.mxu0 %v1757
        %v2201 = vpop.f32.mrf.mxu0
        %v2202 = vadd.f32 %v2105, %v2201
        %v2203 = vpop.f32.mrf.mxu0
        %v2204 = vpop.f32.mrf.mxu0
        %v2205 = vadd.f32 %v2108, %v2204
        %v2206 = vpop.f32.mrf.mxu0
        %2207 = vmatprep.mubr.bf16.mxu0 %v1762
        %2208 = vmatmul.mubr.bf16.gmra.mxu0 %v1761
        %v2209 = vpop.f32.mrf.mxu0
        %v2210 = vadd.f32 %v2113, %v2209
        %v2211 = vpop.f32.mrf.mxu0
        %v2212 = vpop.f32.mrf.mxu0
        %v2213 = vadd.f32 %v2116, %v2212
        %v2214 = vpop.f32.mrf.mxu0
        %2215 = vmatprep.mubr.bf16.mxu0 %v1766
        %2216 = vmatmul.mubr.bf16.gmra.mxu0 %v1765
        %v2217 = vpop.f32.mrf.mxu0
        %v2218 = vadd.f32 %v2121, %v2217
        %v2219 = vpop.f32.mrf.mxu0
        %v2220 = vpop.f32.mrf.mxu0
        %v2221 = vadd.f32 %v2124, %v2220
        %v2222 = vpop.f32.mrf.mxu0
        %2223 = vdwg.mxu0
        %v2224 = vmax.f32 %v2162, 0.0
        %v2225 = vmax.f32 %v2165, 0.0
        %v2226 = vmax.f32 %v2170, 0.0
        %v2227 = vmax.f32 %v2173, 0.0
        %v2228 = vmax.f32 %v2178, 0.0
        %v2229 = vmax.f32 %v2181, 0.0
        %v2230 = vmax.f32 %v2186, 0.0
        %v2231 = vmax.f32 %v2189, 0.0
        %v2232 = vmax.f32 %v2194, 0.0
        %v2233 = vmax.f32 %v2197, 0.0
        %v2234 = vmax.f32 %v2202, 0.0
        %v2235 = vmax.f32 %v2205, 0.0
        %v2236 = vmax.f32 %v2210, 0.0
        %v2237 = vmax.f32 %v2213, 0.0
        %v2238 = vmax.f32 %v2218, 0.0
        %v2239 = vmax.f32 %v2221, 0.0
        %v2240 = vpack.c.bf16 %v2225, %v2224
        %v2241 = vpack.c.bf16 %v2227, %v2226
        %v2242 = vpack.c.bf16 %v2229, %v2228
        %v2243 = vpack.c.bf16 %v2231, %v2230
        %v2244 = vpack.c.bf16 %v2233, %v2232
        %v2245 = vpack.c.bf16 %v2235, %v2234
        %v2246 = vpack.c.bf16 %v2237, %v2236
        %v2247 = vpack.c.bf16 %v2239, %v2238
        %v2248 = vld [vmem:[#allocation2] sm:$0xf]
        %v2249 = vld [vmem:[#allocation2 + $0x4] sm:$0xf]
        %v2250 = vld [vmem:[#allocation2 + $0x8] sm:$0xf]
        %v2251 = vld [vmem:[#allocation2 + $0xc] sm:$0xf]
        %v2252 = vld [vmem:[#allocation2 + $0x10] sm:$0xf]
        %v2253 = vld [vmem:[#allocation2 + $0x14] sm:$0xf]
        %v2254 = vld [vmem:[#allocation2 + $0x18] sm:$0xf]
        %v2255 = vld [vmem:[#allocation2 + $0x1c] sm:$0xf]
        %v2256 = vld [vmem:[#allocation2 + $0x20] sm:$0xf]
        %v2257 = vld [vmem:[#allocation2 + $0x24] sm:$0xf]
        %v2258 = vld [vmem:[#allocation2 + $0x28] sm:$0xf]
        %v2259 = vld [vmem:[#allocation2 + $0x2c] sm:$0xf]
        %v2260 = vld [vmem:[#allocation2 + $0x30] sm:$0xf]
        %v2261 = vld [vmem:[#allocation2 + $0x34] sm:$0xf]
        %v2262 = vld [vmem:[#allocation2 + $0x38] sm:$0xf]
        %v2263 = vld [vmem:[#allocation2 + $0x3c] sm:$0xf]
        %v2264 = vld [vmem:[%s4] sm:$0x1]
        %v2266 = vlaneseq
        %v2267 = vshrl.u32 %v2266, 7
        %v2268 = vsub.s32 0, %v2267
        %v2269 = vrot.slane %v2264, %v2268
        %v2287 = vunpack.c.l.b16 %v2248
        %v2288 = vunpack.c.l.b16 %v2249
        %v2289 = vunpack.c.l.b16 %v2250
        %v2290 = vunpack.c.l.b16 %v2251
        %v2291 = vunpack.c.l.b16 %v2252
        %v2292 = vunpack.c.l.b16 %v2253
        %v2293 = vunpack.c.l.b16 %v2254
        %v2294 = vunpack.c.l.b16 %v2255
        %v2295 = vunpack.c.l.b16 %v2256
        %v2296 = vunpack.c.l.b16 %v2257
        %v2297 = vunpack.c.l.b16 %v2258
        %v2298 = vunpack.c.l.b16 %v2259
        %v2299 = vunpack.c.l.b16 %v2260
        %v2300 = vunpack.c.l.b16 %v2261
        %v2301 = vunpack.c.l.b16 %v2262
        %v2302 = vunpack.c.l.b16 %v2263
        %v2303 = vpack.c.b16 %v2288, %v2287
        %v2304 = vpack.c.b16 %v2290, %v2289
        %v2305 = vpack.c.b16 %v2292, %v2291
        %v2306 = vpack.c.b16 %v2294, %v2293
        %v2307 = vpack.c.b16 %v2296, %v2295
        %v2308 = vpack.c.b16 %v2298, %v2297
        %v2309 = vpack.c.b16 %v2300, %v2299
        %v2310 = vpack.c.b16 %v2302, %v2301
        %2319 = vmatprep.subr.bf16.mxu0 0
        %2320 = vmatpush1.bf16.msra.mxu0 %v2310
        %2321 = vmatprep.subr.bf16.mxu0 0
        %2322 = vmatpush1.bf16.msra.mxu0 %v2309
        %2323 = vmatprep.subr.bf16.mxu0 0
        %2324 = vmatpush1.bf16.msra.mxu0 %v2308
        %2325 = vmatprep.subr.bf16.mxu0 0
        %2326 = vmatpush1.bf16.msra.mxu0 %v2307
        %2327 = vmatprep.subr.bf16.mxu0 0
        %2328 = vmatpush1.bf16.msra.mxu0 %v2306
        %2329 = vmatprep.subr.bf16.mxu0 0
        %2330 = vmatpush1.bf16.msra.mxu0 %v2305
        %2331 = vmatprep.subr.bf16.mxu0 0
        %2332 = vmatpush1.bf16.msra.mxu0 %v2304
        %2333 = vmatprep.subr.bf16.mxu0 0
        %2334 = vmatpush1.bf16.msra.mxu0 %v2303
        %2335 = vmatprep.subr.bf16.mxu0 0
        %2336 = vmatpush2.bf16.msra.mxu0 0
        %2337 = vmatprep.subr.bf16.mxu0 0
        %2338 = vmatpush2.bf16.msra.mxu0 0
        %2339 = vmatprep.subr.bf16.mxu0 0
        %2340 = vmatpush2.bf16.msra.mxu0 0
        %2341 = vmatprep.subr.bf16.mxu0 0
        %2342 = vmatpush2.bf16.msra.mxu0 0
        %2343 = vmatprep.subr.bf16.mxu0 0
        %2344 = vmatpush2.bf16.msra.mxu0 0
        %2345 = vmatprep.subr.bf16.mxu0 0
        %2346 = vmatpush2.bf16.msra.mxu0 0
        %2347 = vmatprep.subr.bf16.mxu0 0
        %2348 = vmatpush2.bf16.msra.mxu0 0
        %2349 = vmatprep.subr.bf16.mxu0 0
        %2350 = vmatpush2.bf16.msra.mxu0 0
        %2351 = vmatprep.mubr.bf16.mxu0 0
        %2352 = vmatmul.mubr.bf16.gmra.mxu0 %v2240
        %v2353 = vpop.f32.mrf.mxu0
        %v2354 = vadd.f32 %v2269, %v2353
        %v2355 = vpop.f32.mrf.mxu0
        %v2356 = vpop.f32.mrf.mxu0
        %v2357 = vadd.f32 %v2269, %v2356
        %v2358 = vpop.f32.mrf.mxu0
        %2359 = vmatprep.mubr.bf16.mxu0 0
        %2360 = vmatmul.mubr.bf16.gmra.mxu0 %v2241
        %v2361 = vpop.f32.mrf.mxu0
        %v2362 = vadd.f32 %v2269, %v2361
        %v2363 = vpop.f32.mrf.mxu0
        %v2364 = vpop.f32.mrf.mxu0
        %v2365 = vadd.f32 %v2269, %v2364
        %v2366 = vpop.f32.mrf.mxu0
        %2367 = vmatprep.mubr.bf16.mxu0 0
        %2368 = vmatmul.mubr.bf16.gmra.mxu0 %v2242
        %v2369 = vpop.f32.mrf.mxu0
        %v2370 = vadd.f32 %v2269, %v2369
        %v2371 = vpop.f32.mrf.mxu0
        %v2372 = vpop.f32.mrf.mxu0
        %v2373 = vadd.f32 %v2269, %v2372
        %v2374 = vpop.f32.mrf.mxu0
        %2375 = vmatprep.mubr.bf16.mxu0 0
        %2376 = vmatmul.mubr.bf16.gmra.mxu0 %v2243
        %v2377 = vpop.f32.mrf.mxu0
        %v2378 = vadd.f32 %v2269, %v2377
        %v2379 = vpop.f32.mrf.mxu0
        %v2380 = vpop.f32.mrf.mxu0
        %v2381 = vadd.f32 %v2269, %v2380
        %v2382 = vpop.f32.mrf.mxu0
        %2383 = vmatprep.mubr.bf16.mxu0 0
        %2384 = vmatmul.mubr.bf16.gmra.mxu0 %v2244
        %v2385 = vpop.f32.mrf.mxu0
        %v2386 = vadd.f32 %v2269, %v2385
        %v2387 = vpop.f32.mrf.mxu0
        %v2388 = vpop.f32.mrf.mxu0
        %v2389 = vadd.f32 %v2269, %v2388
        %v2390 = vpop.f32.mrf.mxu0
        %2391 = vmatprep.mubr.bf16.mxu0 0
        %2392 = vmatmul.mubr.bf16.gmra.mxu0 %v2245
        %v2393 = vpop.f32.mrf.mxu0
        %v2394 = vadd.f32 %v2269, %v2393
        %v2395 = vpop.f32.mrf.mxu0
        %v2396 = vpop.f32.mrf.mxu0
        %v2397 = vadd.f32 %v2269, %v2396
        %v2398 = vpop.f32.mrf.mxu0
        %2399 = vmatprep.mubr.bf16.mxu0 0
        %2400 = vmatmul.mubr.bf16.gmra.mxu0 %v2246
        %v2401 = vpop.f32.mrf.mxu0
        %v2402 = vadd.f32 %v2269, %v2401
        %v2403 = vpop.f32.mrf.mxu0
        %v2404 = vpop.f32.mrf.mxu0
        %v2405 = vadd.f32 %v2269, %v2404
        %v2406 = vpop.f32.mrf.mxu0
        %2407 = vmatprep.mubr.bf16.mxu0 0
        %2408 = vmatmul.mubr.bf16.gmra.mxu0 %v2247
        %v2409 = vpop.f32.mrf.mxu0
        %v2410 = vadd.f32 %v2269, %v2409
        %v2411 = vpop.f32.mrf.mxu0
        %v2412 = vpop.f32.mrf.mxu0
        %v2413 = vadd.f32 %v2269, %v2412
        %v2414 = vpop.f32.mrf.mxu0
        %2415 = vdwg.mxu0
        %v2416 = vpack.c.bf16 %v2357, %v2354
        %v2417 = vpack.c.bf16 %v2365, %v2362
        %v2418 = vpack.c.bf16 %v2373, %v2370
        %v2419 = vpack.c.bf16 %v2381, %v2378
        %v2420 = vpack.c.bf16 %v2389, %v2386
        %v2421 = vpack.c.bf16 %v2397, %v2394
        %v2422 = vpack.c.bf16 %v2405, %v2402
        %v2423 = vpack.c.bf16 %v2413, %v2410
        %v2432 = vunpack.c.l.b16 %v2416
        %v2433 = vunpack.c.h.b16 %v2416
        %v2434 = vunpack.c.l.b16 %v2417
        %v2435 = vunpack.c.h.b16 %v2417
        %v2436 = vunpack.c.l.b16 %v2418
        %v2437 = vunpack.c.h.b16 %v2418
        %v2438 = vunpack.c.l.b16 %v2419
        %v2439 = vunpack.c.h.b16 %v2419
        %v2440 = vunpack.c.l.b16 %v2420
        %v2441 = vunpack.c.h.b16 %v2420
        %v2442 = vunpack.c.l.b16 %v2421
        %v2443 = vunpack.c.h.b16 %v2421
        %v2444 = vunpack.c.l.b16 %v2422
        %v2445 = vunpack.c.h.b16 %v2422
        %v2446 = vunpack.c.l.b16 %v2423
        %v2447 = vunpack.c.h.b16 %v2423
        %v2448 = vpack.c.b16 %v2432, %v2432
        %v2449 = vpack.c.b16 %v2433, %v2433
        %v2450 = vpack.c.b16 %v2434, %v2434
        %v2451 = vpack.c.b16 %v2435, %v2435
        %v2452 = vpack.c.b16 %v2436, %v2436
        %v2453 = vpack.c.b16 %v2437, %v2437
        %v2454 = vpack.c.b16 %v2438, %v2438
        %v2455 = vpack.c.b16 %v2439, %v2439
        %v2456 = vpack.c.b16 %v2440, %v2440
        %v2457 = vpack.c.b16 %v2441, %v2441
        %v2458 = vpack.c.b16 %v2442, %v2442
        %v2459 = vpack.c.b16 %v2443, %v2443
        %v2460 = vpack.c.b16 %v2444, %v2444
        %v2461 = vpack.c.b16 %v2445, %v2445
        %v2462 = vpack.c.b16 %v2446, %v2446
        %v2463 = vpack.c.b16 %v2447, %v2447
        %2480 = vst [vmem:[%s233] sm:$0xf] %v2448
        %2481 = vst [vmem:[%s233 + $0x4] sm:$0xf] %v2449
        %2482 = vst [vmem:[%s233 + $0x8] sm:$0xf] %v2450
        %2483 = vst [vmem:[%s233 + $0xc] sm:$0xf] %v2451
        %2484 = vst [vmem:[%s233 + $0x10] sm:$0xf] %v2452
        %2485 = vst [vmem:[%s233 + $0x14] sm:$0xf] %v2453
        %2486 = vst [vmem:[%s233 + $0x18] sm:$0xf] %v2454
        %2487 = vst [vmem:[%s233 + $0x1c] sm:$0xf] %v2455
        %2488 = vst [vmem:[%s233 + $0x20] sm:$0xf] %v2456
        %2489 = vst [vmem:[%s233 + $0x24] sm:$0xf] %v2457
        %2490 = vst [vmem:[%s233 + $0x28] sm:$0xf] %v2458
        %2491 = vst [vmem:[%s233 + $0x2c] sm:$0xf] %v2459
        %2492 = vst [vmem:[%s233 + $0x30] sm:$0xf] %v2460
        %2493 = vst [vmem:[%s233 + $0x34] sm:$0xf] %v2461
        %2494 = vst [vmem:[%s233 + $0x38] sm:$0xf] %v2462
        %2495 = vst [vmem:[%s233 + $0x3c] sm:$0xf] %v2463
        %s2496 = sand.u32 %s138, 1
        %s2497 = scalar_lea.sflag [#allocation4], %s2496
        %s2498 = sand.u32 %s138, 1
        %s2499 = smul.addr %s2498, 64
        %s2500 = scalar_lea.vmem [#allocation5], %s2499
        // Predicated region
        $region45: #{tpu_custom_call.1} parent=39 // pred_check
          %p2501 = pneg %p148
        $region46: #{tpu_custom_call.1} parent=39 // pred_check_branch
          %2503 = sbr.rel (%p2501) target = $region48
        $region47: #{tpu_custom_call.1} parent=39 // pred_region
          %s2504 = smul.u32 16, %s20
          %s2506 = ssub.s32 1024, 1024
          %2507 = vsyncadd %s2497, %s2506
          %s2508 = smul.addr %s2504, 64
          %s2509 = scalar_lea.hbm %s5, %s2508
          %s2510 = sshll.u32 %s2500, 4
          %s2511 = int_to_ptr.vmem [resolvable:$true] %s2510
          %2516 = dma.vmem_to_hbm [thread:$0]  %s2511, 1024, %s2509, %s2497, 64, 64, 4
        $region48: #{tpu_custom_call.1} parent=39 // pred_fallthru
          _
      $region40: #{tpu_custom_call.1} parent=5 // pred_fallthru
        _
      %p2517 = scmp.le.s32.totalorder 2, %s15
      // Predicated region
      $region49: #{tpu_custom_call.1} parent=5 // pred_check
        %p2518 = pneg %p2517
      $region50: #{tpu_custom_call.1} parent=5 // pred_check_branch
        %2520 = sbr.rel (%p2518) target = $region52
      $region51: #{tpu_custom_call.1} parent=5 // pred_region
        %s2521 = ssub.s32 %s15, 2
        // Predicated region
        $region53: #{tpu_custom_call.1} parent=51 // pred_check
          %p2522 = pneg %p154
        $region54: #{tpu_custom_call.1} parent=51 // pred_check_branch
          %2524 = sbr.rel (%p2522) target = $region56
        $region55: #{tpu_custom_call.1} parent=51 // pred_region
          %s2525 = sand.u32 %s139, 1
          %s2526 = scalar_lea.sflag [#allocation4], %s2525
          %s2527 = sand.u32 %s139, 1
          %s2528 = smul.addr %s2527, 64
          %s2529 = scalar_lea.vmem [#allocation5], %s2528
          %2530 = dma.done %s2526, 1024
        $region56: #{tpu_custom_call.1} parent=51 // pred_fallthru
          _
      $region52: #{tpu_custom_call.1} parent=5 // pred_fallthru
        _
    $region6: #{tpu_custom_call.1} parent=1 // loop_footer
      %s19 = sadd.s32 1, %s15
    $region7: #{tpu_custom_call.1} parent=1 // loop_footer_branch
      %14 = sbr.rel target = $region3
    $region8: #{tpu_custom_call.1} parent=1 // loop_exit
      _
    %2531 = vsyncpa [#allocation3], 1
    %s2532 = scalar_lea.sflag [#allocation3], 1
    %2533 = vsyncpa %s2532, 1
    %2534 = vsyncpa [#allocation4], 1
    %s2535 = scalar_lea.sflag [#allocation4], 1
    %2536 = vsyncpa %s2535, 1

</llo_original>
